<compile_context>
chip_gen: v5e
topology: v5e:2x2
jax: 0.10.0
libtpu: 0.0.40
codegen_flags: <defaults>
</compile_context>

<pallas_src>
import functools

import jax
import jax.numpy as jnp
import numpy as np
from jax.experimental import pallas as pl
from jax.experimental.pallas import tpu as pltpu


# ----------------------------------------------------------------------------
# In-kernel helpers: activations are (C, L) with channels in sublanes and the
# flattened (rows, W) spatial positions of one H tile (incl. halo) in lanes.
# ----------------------------------------------------------------------------
def _roll_lanes(x, shift):
    """Cyclic shift along the lane axis: y[i] = x[(i - shift) mod L]."""
    L = x.shape[-1]
    shift = shift % L
    if shift == 0:
        return x
    if L % 128 == 0:
        return pltpu.roll(x, shift, 1)                     # XLU lane rotation
    return jnp.concatenate([x[:, L - shift:], x[:, :L - shift]], axis=1)


def _depthwise3x3_relu(x, dw, db, cm_m1, cm_p1, W):
    """Depthwise 3x3 conv + bias + ReLU.

    Column (W) padding is emulated by zeroing *source* columns once (cm_m1 zeroes
    column W-1, used by kx=-1 taps; cm_p1 zeroes column 0, used by kx=+1 taps), so
    the lane roll delivers exactly the zero that conv padding requires.  Row (H)
    padding is handled by the tile halo (out-of-range rows are discarded later).

    x: (C, L) f32, dw: (9, C, 1), db: (C, 1), cm_*: (1, L).
    """
    L = x.shape[-1]
    src = {-1: x * cm_m1, 0: x, 1: x * cm_p1}
    terms = []
    for ky in (-1, 0, 1):
        for kx in (-1, 0, 1):
            t = (ky + 1) * 3 + (kx + 1)
            if ky == 0 and kx == 0:
                terms.append(x * dw[4])                    # center: no roll, no mask
            else:
                shifted = _roll_lanes(src[kx], (-(ky * W + kx)) % L)
                terms.append(shifted * dw[t])
    # Pairwise (tree) accumulation: exposes ILP to the 4-wide VALU.
    while len(terms) > 1:
        nxt = [terms[i] + terms[i + 1] for i in range(0, len(terms) - 1, 2)]
        if len(terms) % 2:
            nxt.append(terms[-1])
        terms = nxt
    return jnp.maximum(terms[0] + db, 0.0)


def _pointwise(h, pw, pb, groups, cin_g, use_mxu, mxu_cast_dtype):
    """1x1 conv per image group: (Cout, Cin) x (Cin, L) -> (Cout, L), + bias.

    h holds `groups` images stacked along sublanes (groups*cin_g rows)."""
    outs = []
    for g in range(groups):
        base = g * cin_g
        if use_mxu:
            a, b = pw, h[base:base + cin_g, :]
            if mxu_cast_dtype is not None:                 # bf16 MXU fast path (v6e/v7x)
                a, b = a.astype(mxu_cast_dtype), b.astype(mxu_cast_dtype)
            o = jnp.dot(a, b, preferred_element_type=jnp.float32) + pb
        else:
            # Small K: VPU outer-product FMAs, fully lane-dense.
            o = pw[:, 0:1] * h[base:base + 1, :]
            for ci in range(1, cin_g):
                o = o + pw[:, ci:ci + 1] * h[base + ci:base + ci + 1, :]
            o = o + pb
        outs.append(o)
    return outs[0] if groups == 1 else jnp.concatenate(outs, axis=0)


def fused_double_dwconv_kernel(x_ref, cm_m1_ref, cm_p1_ref, rkeep_ref,
                               dw1_ref, db1_ref, pw1_ref, pb1_ref,
                               dw2_ref, db2_ref, pw2_ref, pb2_ref,
                               o_ref, *, W, tile_h, groups, cin, cmid,
                               mxu1, mxu2, mxu_cast_dtype):
    """Fused dw3x3+ReLU -> pw1x1 -> dw3x3+ReLU -> pw1x1 on one haloed H tile."""
    x = x_ref[...].astype(jnp.float32)                     # (groups*Cin, (TH+4)*W)
    cm_m1 = cm_m1_ref[...]                                 # (1, L): zero at col W-1
    cm_p1 = cm_p1_ref[...]                                 # (1, L): zero at col 0

    # ---- block 1 ----
    a1 = _depthwise3x3_relu(x, dw1_ref[...], db1_ref[...], cm_m1, cm_p1, W)
    h1 = _pointwise(a1, pw1_ref[...], pb1_ref[...], groups, cin, mxu1, mxu_cast_dtype)
    # Zero halo rows that fall outside the image: block 2's padding must see zeros,
    # not block-1 outputs computed over padding rows.
    h1 = h1 * rkeep_ref[...]

    # ---- block 2 ----
    a2 = _depthwise3x3_relu(h1, dw2_ref[...], db2_ref[...], cm_m1, cm_p1, W)
    h2 = _pointwise(a2, pw2_ref[...], pb2_ref[...], groups, cmid, mxu2, mxu_cast_dtype)

    # Drop the 2-row halo at each end and store the TH interior rows.
    o_ref[...] = h2[:, 2 * W:(tile_h + 2) * W].astype(o_ref.dtype)


# ----------------------------------------------------------------------------
# Wrapper
# ----------------------------------------------------------------------------
def _prep_block_params(dww, dwb, pww, pwb):
    """PyTorch conv layouts -> kernel layouts (tiny reshapes, done once outside)."""
    C = dww.shape[0]
    Cout = pww.shape[0]
    dw_k = jnp.transpose(dww.reshape(C, 9), (1, 0)).reshape(9, C, 1)
    db_k = dwb.reshape(C, 1)
    pw_k = pww.reshape(Cout, C)
    pb_k = pwb.reshape(Cout, 1)
    return dw_k, db_k, pw_k, pb_k


def _pick_tile_h(H, W, G, cin, cmid, cout, budget_bytes=18 * 1024 * 1024):
    """Largest H tile (divisor of H) whose per-step f32 working set fits the budget
    (double-buffered I/O blocks + in-kernel temporaries); keeps v7x (64 MiB) safe."""
    def est_bytes(th):
        L = (th + 4) * W
        io = 2 * (G * cin) * L + 2 * (G * cout) * th * W
        tmp = (3 * G * cin + 3 * G * cmid + 2 * G * cout) * L
        return 4 * (io + tmp)
    for th in sorted((d for d in range(1, H + 1) if H % d == 0), reverse=True):
        if est_bytes(th) <= budget_bytes:
            return th
    return 1


def double_dwconv_pallas(x_nchw, params, *, tile_h=None, group=None,
                         mxu_min_k=32, mxu_cast_dtype=jnp.bfloat16,
                         vmem_limit_bytes=48 * 1024 * 1024):
    """DoubleDWConv.forward.  Input/Output are NCHW (like PyTorch)."""
    N, Cin, H, W = x_nchw.shape
    p1, p2 = params
    dw1b, db1b, pw1k, pb1k = _prep_block_params(*p1)
    dw2b, db2b, pw2k, pb2k = _prep_block_params(*p2)
    Cmid = pw1k.shape[0]
    Cout = pw2k.shape[0]

    # Sublane-fill grouping: stack G images per grid step when Cin < 8.
    if group is None:
        group = max(1, 8 // max(Cin, 1))
    G = max(1, int(group))
    while G > 1 and N % G != 0:
        G -= 1
    NG = N // G

    # H tile with a 2-row halo per side (3x3 o 3x3 receptive field).
    if tile_h is None:
        tile_h = _pick_tile_h(H, W, G, Cin, Cmid, Cout)
    TH = int(tile_h)
    if H % TH != 0:
        # TODO(synk): support ragged last tiles (H not divisible by tile_h).
        raise ValueError(f"tile_h={TH} must divide H={H}")
    nT = H // TH
    L = (TH + 4) * W

    # G-fold tiled depthwise weights (channel axis matches the stacked images).
    dw1 = jnp.tile(dw1b, (1, G, 1)); db1 = jnp.tile(db1b, (G, 1))
    dw2 = jnp.tile(dw2b, (1, G, 1)); db2 = jnp.tile(db2b, (G, 1))

    # Haloed overlapping input tiles (zero rows == depthwise padding rows).
    x_pad = jnp.pad(x_nchw, ((0, 0), (0, 0), (2, 2), (0, 0)))
    rows = jnp.arange(nT)[:, None] * TH + jnp.arange(TH + 4)[None, :]   # (nT, TH+4)
    xt = x_pad[:, :, rows, :]                                 # (N, Cin, nT, TH+4, W)
    xt = xt.transpose(0, 2, 1, 3, 4)                          # (N, nT, Cin, TH+4, W)
    xt = xt.reshape(NG, G, nT, Cin, TH + 4, W).transpose(0, 2, 1, 3, 4, 5)
    x_tiles = xt.reshape(NG, nT, G * Cin, L)

    # Host-precomputed masks (resident across grid steps).
    col = jnp.arange(L) % W
    cm_m1 = (col != (W - 1)).astype(jnp.float32).reshape(1, L)  # source mask, kx=-1 taps
    cm_p1 = (col != 0).astype(jnp.float32).reshape(1, L)        # source mask, kx=+1 taps
    orig_row = jnp.arange(L)[None, :] // W - 2 + (jnp.arange(nT) * TH)[:, None]
    row_keep = ((orig_row >= 0) & (orig_row < H)).astype(jnp.float32).reshape(nT, 1, L)

    kernel = functools.partial(
        fused_double_dwconv_kernel, W=W, tile_h=TH, groups=G, cin=Cin, cmid=Cmid,
        mxu1=Cin >= mxu_min_k, mxu2=Cmid >= mxu_min_k, mxu_cast_dtype=mxu_cast_dtype)

    def wspec(shape):
        return pl.BlockSpec(shape, lambda n, t: (0,) * len(shape))

    out_tiles = pl.pallas_call(
        kernel,
        out_shape=jax.ShapeDtypeStruct((NG, nT, G * Cout, TH * W), x_nchw.dtype),
        grid=(NG, nT),
        in_specs=[
            pl.BlockSpec((None, None, G * Cin, L), lambda n, t: (n, t, 0, 0)),
            wspec((1, L)),                                    # cm_m1
            wspec((1, L)),                                    # cm_p1
            pl.BlockSpec((None, 1, L), lambda n, t: (t, 0, 0)),  # row_keep (per tile)
            wspec((9, G * Cin, 1)), wspec((G * Cin, 1)),
            wspec((Cmid, Cin)), wspec((Cmid, 1)),
            wspec((9, G * Cmid, 1)), wspec((G * Cmid, 1)),
            wspec((Cout, Cmid)), wspec((Cout, 1)),
        ],
        out_specs=pl.BlockSpec((None, None, G * Cout, TH * W),
                               lambda n, t: (n, t, 0, 0)),
        compiler_params=pltpu.CompilerParams(
            dimension_semantics=("parallel", "parallel"),
            vmem_limit_bytes=vmem_limit_bytes),
    )(x_tiles, cm_m1, cm_p1, row_keep,
      dw1, db1, pw1k, pb1k, dw2, db2, pw2k, pb2k)

    out = out_tiles.reshape(NG, nT, G, Cout, TH, W)
    out = out.transpose(0, 2, 3, 1, 4, 5).reshape(N, Cout, H, W)
    return out


# ----------------------------------------------------------------------------
# Pure-JAX reference (mirrors the PyTorch forward exactly) for verification.
# ----------------------------------------------------------------------------
def _block_ref(x_nchw, dww, dwb, pww, pwb):
    C = x_nchw.shape[1]
    y = jax.lax.conv_general_dilated(
        x_nchw, dww, (1, 1), ((1, 1), (1, 1)),
        dimension_numbers=("NCHW", "OIHW", "NCHW"), feature_group_count=C)
    y = jnp.maximum(y + dwb.reshape(1, C, 1, 1), 0.0)
    z = jax.lax.conv_general_dilated(
        y, pww, (1, 1), ((0, 0), (0, 0)),
        dimension_numbers=("NCHW", "OIHW", "NCHW"))
    return z + pwb.reshape(1, -1, 1, 1)


def double_dwconv_ref(x_nchw, params):
    p1, p2 = params
    return _block_ref(_block_ref(x_nchw, *p1), *p2)


def make_block_params(key, cin, cout):
    """Params in PyTorch conv layouts: dw (C,1,3,3), pw (Cout,Cin,1,1)."""
    k = jax.random.split(key, 4)
    dww = jax.random.normal(k[0], (cin, 1, 3, 3), jnp.float32) * 0.2
    dwb = jax.random.normal(k[1], (cin,), jnp.float32) * 0.05
    pww = jax.random.normal(k[2], (cout, cin, 1, 1), jnp.float32) * 0.2
    pwb = jax.random.normal(k[3], (cout,), jnp.float32) * 0.05
    return (dww, dwb, pww, pwb)


if __name__ == "__main__":
    N, Cin, Cout, H, W = 2, 4, 8, 16, 16

    key = jax.random.PRNGKey(0)
    kx_, k1, k2 = jax.random.split(key, 3)
    x = jax.random.normal(kx_, (N, Cin, H, W), jnp.float32)   # NCHW like PyTorch

    params = (make_block_params(k1, Cin, Cout),
              make_block_params(k2, Cout, Cout))

    ref = jax.block_until_ready(double_dwconv_ref(x, params))

    # Multi-tile halo path with sublane grouping (G=2), slice+concat roll fallback.
    out_a = jax.block_until_ready(double_dwconv_pallas(x, params, tile_h=8))
    assert out_a.shape == (N, Cout, H, W), out_a.shape
    np.testing.assert_allclose(np.asarray(out_a), np.asarray(ref),
                               rtol=1e-4, atol=1e-4)

    # Lane-aligned path (tile lanes = 128): pltpu.roll fast path, ungrouped.
    out_b = jax.block_until_ready(double_dwconv_pallas(x, params, tile_h=4, group=1))
    np.testing.assert_allclose(np.asarray(out_b), np.asarray(ref),
                               rtol=1e-4, atol=1e-4)

    print("KERNEL_OK")
</pallas_src>

<mosaic_0001>
module attributes {stable_mosaic.version = 11 : i64} {
  func.func @fused_double_dwconv_kernel(%arg0: i32, %arg1: i32, %arg2: memref<1x1x8x192xf32, #tpu.memory_space<vmem>>, %arg3: memref<1x192xf32, #tpu.memory_space<vmem>>, %arg4: memref<1x192xf32, #tpu.memory_space<vmem>>, %arg5: memref<1x1x192xf32, #tpu.memory_space<vmem>>, %arg6: memref<9x8x1xf32, #tpu.memory_space<vmem>>, %arg7: memref<8x1xf32, #tpu.memory_space<vmem>>, %arg8: memref<8x4xf32, #tpu.memory_space<vmem>>, %arg9: memref<8x1xf32, #tpu.memory_space<vmem>>, %arg10: memref<9x16x1xf32, #tpu.memory_space<vmem>>, %arg11: memref<16x1xf32, #tpu.memory_space<vmem>>, %arg12: memref<8x8xf32, #tpu.memory_space<vmem>>, %arg13: memref<8x1xf32, #tpu.memory_space<vmem>>, %arg14: memref<1x1x16x128xf32, #tpu.memory_space<vmem>>) attributes {dimension_semantics = [#tpu.dimension_semantics<parallel>, #tpu.dimension_semantics<parallel>], iteration_bounds = array<i64: 1, 2>, scalar_prefetch = 0 : i64, scratch_operands = 0 : i64, tpu.core_type = #tpu.core_type<tc>, window_params = [{transform_indices = @transform_0, window_bounds = array<i64: 1, 1, 8, 192>}, {pipeline_mode = #tpu.pipeline_mode<synchronous>, transform_indices = @transform_1, window_bounds = array<i64: 1, 192>}, {pipeline_mode = #tpu.pipeline_mode<synchronous>, transform_indices = @transform_2, window_bounds = array<i64: 1, 192>}, {transform_indices = @transform_3, window_bounds = array<i64: 1, 1, 192>}, {pipeline_mode = #tpu.pipeline_mode<synchronous>, transform_indices = @transform_4, window_bounds = array<i64: 9, 8, 1>}, {pipeline_mode = #tpu.pipeline_mode<synchronous>, transform_indices = @transform_5, window_bounds = array<i64: 8, 1>}, {pipeline_mode = #tpu.pipeline_mode<synchronous>, transform_indices = @transform_6, window_bounds = array<i64: 8, 4>}, {pipeline_mode = #tpu.pipeline_mode<synchronous>, transform_indices = @transform_7, window_bounds = array<i64: 8, 1>}, {pipeline_mode = #tpu.pipeline_mode<synchronous>, transform_indices = @transform_8, window_bounds = array<i64: 9, 16, 1>}, {pipeline_mode = #tpu.pipeline_mode<synchronous>, transform_indices = @transform_9, window_bounds = array<i64: 16, 1>}, {pipeline_mode = #tpu.pipeline_mode<synchronous>, transform_indices = @transform_10, window_bounds = array<i64: 8, 8>}, {pipeline_mode = #tpu.pipeline_mode<synchronous>, transform_indices = @transform_11, window_bounds = array<i64: 8, 1>}, {transform_indices = @transform_12, window_bounds = array<i64: 1, 1, 16, 128>}]} {
    %c0 = arith.constant 0 : index
    %c0_0 = arith.constant 0 : index
    %c0_1 = arith.constant 0 : index
    %c0_2 = arith.constant 0 : index
    %0 = vector.load %arg2[%c0, %c0_0, %c0_1, %c0_2] : memref<1x1x8x192xf32, #tpu.memory_space<vmem>>, vector<1x1x8x192xf32>
    %1 = vector.shape_cast %0 : vector<1x1x8x192xf32> to vector<8x192xf32>
    %c0_3 = arith.constant 0 : index
    %c0_4 = arith.constant 0 : index
    %2 = vector.load %arg3[%c0_3, %c0_4] : memref<1x192xf32, #tpu.memory_space<vmem>>, vector<1x192xf32>
    %c0_5 = arith.constant 0 : index
    %c0_6 = arith.constant 0 : index
    %3 = vector.load %arg4[%c0_5, %c0_6] : memref<1x192xf32, #tpu.memory_space<vmem>>, vector<1x192xf32>
    %c0_7 = arith.constant 0 : index
    %c0_8 = arith.constant 0 : index
    %c0_9 = arith.constant 0 : index
    %4 = vector.load %arg6[%c0_7, %c0_8, %c0_9] : memref<9x8x1xf32, #tpu.memory_space<vmem>>, vector<9x8x1xf32>
    %c0_10 = arith.constant 0 : index
    %c0_11 = arith.constant 0 : index
    %5 = vector.load %arg7[%c0_10, %c0_11] : memref<8x1xf32, #tpu.memory_space<vmem>>, vector<8x1xf32>
    %6 = vector.broadcast %2 : vector<1x192xf32> to vector<8x192xf32>
    %7 = arith.mulf %1, %6 : vector<8x192xf32>
    %8 = vector.broadcast %3 : vector<1x192xf32> to vector<8x192xf32>
    %9 = arith.mulf %1, %8 : vector<8x192xf32>
    %10 = vector.extract_strided_slice %7 {offsets = [0, 175], sizes = [8, 17], strides = [1, 1]} : vector<8x192xf32> to vector<8x17xf32>
    %11 = vector.extract_strided_slice %7 {offsets = [0, 0], sizes = [8, 175], strides = [1, 1]} : vector<8x192xf32> to vector<8x175xf32>
    %12 = tpu.concatenate %10, %11 in 1 : vector<8x17xf32>, vector<8x175xf32> -> vector<8x192xf32>
    %13 = vector.extract_strided_slice %4 {offsets = [0, 0, 0], sizes = [1, 8, 1], strides = [1, 1, 1]} : vector<9x8x1xf32> to vector<1x8x1xf32>
    %14 = vector.shape_cast %13 : vector<1x8x1xf32> to vector<8x1xf32>
    %15 = vector.broadcast %14 : vector<8x1xf32> to vector<8x192xf32>
    %16 = arith.mulf %12, %15 : vector<8x192xf32>
    %17 = vector.extract_strided_slice %1 {offsets = [0, 176], sizes = [8, 16], strides = [1, 1]} : vector<8x192xf32> to vector<8x16xf32>
    %18 = vector.extract_strided_slice %1 {offsets = [0, 0], sizes = [8, 176], strides = [1, 1]} : vector<8x192xf32> to vector<8x176xf32>
    %19 = tpu.concatenate %17, %18 in 1 : vector<8x16xf32>, vector<8x176xf32> -> vector<8x192xf32>
    %20 = vector.extract_strided_slice %4 {offsets = [1, 0, 0], sizes = [1, 8, 1], strides = [1, 1, 1]} : vector<9x8x1xf32> to vector<1x8x1xf32>
    %21 = vector.shape_cast %20 : vector<1x8x1xf32> to vector<8x1xf32>
    %22 = vector.broadcast %21 : vector<8x1xf32> to vector<8x192xf32>
    %23 = arith.mulf %19, %22 : vector<8x192xf32>
    %24 = vector.extract_strided_slice %9 {offsets = [0, 177], sizes = [8, 15], strides = [1, 1]} : vector<8x192xf32> to vector<8x15xf32>
    %25 = vector.extract_strided_slice %9 {offsets = [0, 0], sizes = [8, 177], strides = [1, 1]} : vector<8x192xf32> to vector<8x177xf32>
    %26 = tpu.concatenate %24, %25 in 1 : vector<8x15xf32>, vector<8x177xf32> -> vector<8x192xf32>
    %27 = vector.extract_strided_slice %4 {offsets = [2, 0, 0], sizes = [1, 8, 1], strides = [1, 1, 1]} : vector<9x8x1xf32> to vector<1x8x1xf32>
    %28 = vector.shape_cast %27 : vector<1x8x1xf32> to vector<8x1xf32>
    %29 = vector.broadcast %28 : vector<8x1xf32> to vector<8x192xf32>
    %30 = arith.mulf %26, %29 : vector<8x192xf32>
    %31 = vector.extract_strided_slice %7 {offsets = [0, 191], sizes = [8, 1], strides = [1, 1]} : vector<8x192xf32> to vector<8x1xf32>
    %32 = vector.extract_strided_slice %7 {offsets = [0, 0], sizes = [8, 191], strides = [1, 1]} : vector<8x192xf32> to vector<8x191xf32>
    %33 = tpu.concatenate %31, %32 in 1 : vector<8x1xf32>, vector<8x191xf32> -> vector<8x192xf32>
    %34 = vector.extract_strided_slice %4 {offsets = [3, 0, 0], sizes = [1, 8, 1], strides = [1, 1, 1]} : vector<9x8x1xf32> to vector<1x8x1xf32>
    %35 = vector.shape_cast %34 : vector<1x8x1xf32> to vector<8x1xf32>
    %36 = vector.broadcast %35 : vector<8x1xf32> to vector<8x192xf32>
    %37 = arith.mulf %33, %36 : vector<8x192xf32>
    %38 = vector.extract_strided_slice %4 {offsets = [4, 0, 0], sizes = [1, 8, 1], strides = [1, 1, 1]} : vector<9x8x1xf32> to vector<1x8x1xf32>
    %39 = vector.shape_cast %38 : vector<1x8x1xf32> to vector<8x1xf32>
    %40 = vector.broadcast %39 : vector<8x1xf32> to vector<8x192xf32>
    %41 = arith.mulf %1, %40 : vector<8x192xf32>
    %42 = vector.extract_strided_slice %9 {offsets = [0, 1], sizes = [8, 191], strides = [1, 1]} : vector<8x192xf32> to vector<8x191xf32>
    %43 = vector.extract_strided_slice %9 {offsets = [0, 0], sizes = [8, 1], strides = [1, 1]} : vector<8x192xf32> to vector<8x1xf32>
    %44 = tpu.concatenate %42, %43 in 1 : vector<8x191xf32>, vector<8x1xf32> -> vector<8x192xf32>
    %45 = vector.extract_strided_slice %4 {offsets = [5, 0, 0], sizes = [1, 8, 1], strides = [1, 1, 1]} : vector<9x8x1xf32> to vector<1x8x1xf32>
    %46 = vector.shape_cast %45 : vector<1x8x1xf32> to vector<8x1xf32>
    %47 = vector.broadcast %46 : vector<8x1xf32> to vector<8x192xf32>
    %48 = arith.mulf %44, %47 : vector<8x192xf32>
    %49 = vector.extract_strided_slice %7 {offsets = [0, 15], sizes = [8, 177], strides = [1, 1]} : vector<8x192xf32> to vector<8x177xf32>
    %50 = vector.extract_strided_slice %7 {offsets = [0, 0], sizes = [8, 15], strides = [1, 1]} : vector<8x192xf32> to vector<8x15xf32>
    %51 = tpu.concatenate %49, %50 in 1 : vector<8x177xf32>, vector<8x15xf32> -> vector<8x192xf32>
    %52 = vector.extract_strided_slice %4 {offsets = [6, 0, 0], sizes = [1, 8, 1], strides = [1, 1, 1]} : vector<9x8x1xf32> to vector<1x8x1xf32>
    %53 = vector.shape_cast %52 : vector<1x8x1xf32> to vector<8x1xf32>
    %54 = vector.broadcast %53 : vector<8x1xf32> to vector<8x192xf32>
    %55 = arith.mulf %51, %54 : vector<8x192xf32>
    %56 = vector.extract_strided_slice %1 {offsets = [0, 16], sizes = [8, 176], strides = [1, 1]} : vector<8x192xf32> to vector<8x176xf32>
    %57 = vector.extract_strided_slice %1 {offsets = [0, 0], sizes = [8, 16], strides = [1, 1]} : vector<8x192xf32> to vector<8x16xf32>
    %58 = tpu.concatenate %56, %57 in 1 : vector<8x176xf32>, vector<8x16xf32> -> vector<8x192xf32>
    %59 = vector.extract_strided_slice %4 {offsets = [7, 0, 0], sizes = [1, 8, 1], strides = [1, 1, 1]} : vector<9x8x1xf32> to vector<1x8x1xf32>
    %60 = vector.shape_cast %59 : vector<1x8x1xf32> to vector<8x1xf32>
    %61 = vector.broadcast %60 : vector<8x1xf32> to vector<8x192xf32>
    %62 = arith.mulf %58, %61 : vector<8x192xf32>
    %63 = vector.extract_strided_slice %9 {offsets = [0, 17], sizes = [8, 175], strides = [1, 1]} : vector<8x192xf32> to vector<8x175xf32>
    %64 = vector.extract_strided_slice %9 {offsets = [0, 0], sizes = [8, 17], strides = [1, 1]} : vector<8x192xf32> to vector<8x17xf32>
    %65 = tpu.concatenate %63, %64 in 1 : vector<8x175xf32>, vector<8x17xf32> -> vector<8x192xf32>
    %66 = vector.extract_strided_slice %4 {offsets = [8, 0, 0], sizes = [1, 8, 1], strides = [1, 1, 1]} : vector<9x8x1xf32> to vector<1x8x1xf32>
    %67 = vector.shape_cast %66 : vector<1x8x1xf32> to vector<8x1xf32>
    %68 = vector.broadcast %67 : vector<8x1xf32> to vector<8x192xf32>
    %69 = arith.mulf %65, %68 : vector<8x192xf32>
    %70 = arith.addf %16, %23 : vector<8x192xf32>
    %71 = arith.addf %30, %37 : vector<8x192xf32>
    %72 = arith.addf %41, %48 : vector<8x192xf32>
    %73 = arith.addf %55, %62 : vector<8x192xf32>
    %74 = arith.addf %70, %71 : vector<8x192xf32>
    %75 = arith.addf %72, %73 : vector<8x192xf32>
    %76 = arith.addf %74, %75 : vector<8x192xf32>
    %77 = arith.addf %76, %69 : vector<8x192xf32>
    %78 = vector.broadcast %5 : vector<8x1xf32> to vector<8x192xf32>
    %79 = arith.addf %77, %78 : vector<8x192xf32>
    %cst = arith.constant 0.000000e+00 : f32
    %80 = vector.broadcast %cst : f32 to vector<8x192xf32>
    %81 = arith.maximumf %79, %80 : vector<8x192xf32>
    %c0_12 = arith.constant 0 : index
    %c0_13 = arith.constant 0 : index
    %82 = vector.load %arg8[%c0_12, %c0_13] : memref<8x4xf32, #tpu.memory_space<vmem>>, vector<8x4xf32>
    %c0_14 = arith.constant 0 : index
    %c0_15 = arith.constant 0 : index
    %83 = vector.load %arg9[%c0_14, %c0_15] : memref<8x1xf32, #tpu.memory_space<vmem>>, vector<8x1xf32>
    %84 = vector.extract_strided_slice %82 {offsets = [0, 0], sizes = [8, 1], strides = [1, 1]} : vector<8x4xf32> to vector<8x1xf32>
    %85 = vector.extract_strided_slice %81 {offsets = [0, 0], sizes = [1, 192], strides = [1, 1]} : vector<8x192xf32> to vector<1x192xf32>
    %86 = vector.broadcast %84 : vector<8x1xf32> to vector<8x192xf32>
    %87 = vector.broadcast %85 : vector<1x192xf32> to vector<8x192xf32>
    %88 = arith.mulf %86, %87 : vector<8x192xf32>
    %89 = vector.extract_strided_slice %82 {offsets = [0, 1], sizes = [8, 1], strides = [1, 1]} : vector<8x4xf32> to vector<8x1xf32>
    %90 = vector.extract_strided_slice %81 {offsets = [1, 0], sizes = [1, 192], strides = [1, 1]} : vector<8x192xf32> to vector<1x192xf32>
    %91 = vector.broadcast %89 : vector<8x1xf32> to vector<8x192xf32>
    %92 = vector.broadcast %90 : vector<1x192xf32> to vector<8x192xf32>
    %93 = arith.mulf %91, %92 : vector<8x192xf32>
    %94 = arith.addf %88, %93 : vector<8x192xf32>
    %95 = vector.extract_strided_slice %82 {offsets = [0, 2], sizes = [8, 1], strides = [1, 1]} : vector<8x4xf32> to vector<8x1xf32>
    %96 = vector.extract_strided_slice %81 {offsets = [2, 0], sizes = [1, 192], strides = [1, 1]} : vector<8x192xf32> to vector<1x192xf32>
    %97 = vector.broadcast %95 : vector<8x1xf32> to vector<8x192xf32>
    %98 = vector.broadcast %96 : vector<1x192xf32> to vector<8x192xf32>
    %99 = arith.mulf %97, %98 : vector<8x192xf32>
    %100 = arith.addf %94, %99 : vector<8x192xf32>
    %101 = vector.extract_strided_slice %82 {offsets = [0, 3], sizes = [8, 1], strides = [1, 1]} : vector<8x4xf32> to vector<8x1xf32>
    %102 = vector.extract_strided_slice %81 {offsets = [3, 0], sizes = [1, 192], strides = [1, 1]} : vector<8x192xf32> to vector<1x192xf32>
    %103 = vector.broadcast %101 : vector<8x1xf32> to vector<8x192xf32>
    %104 = vector.broadcast %102 : vector<1x192xf32> to vector<8x192xf32>
    %105 = arith.mulf %103, %104 : vector<8x192xf32>
    %106 = arith.addf %100, %105 : vector<8x192xf32>
    %107 = vector.broadcast %83 : vector<8x1xf32> to vector<8x192xf32>
    %108 = arith.addf %106, %107 : vector<8x192xf32>
    %109 = vector.extract_strided_slice %82 {offsets = [0, 0], sizes = [8, 1], strides = [1, 1]} : vector<8x4xf32> to vector<8x1xf32>
    %110 = vector.extract_strided_slice %81 {offsets = [4, 0], sizes = [1, 192], strides = [1, 1]} : vector<8x192xf32> to vector<1x192xf32>
    %111 = vector.broadcast %109 : vector<8x1xf32> to vector<8x192xf32>
    %112 = vector.broadcast %110 : vector<1x192xf32> to vector<8x192xf32>
    %113 = arith.mulf %111, %112 : vector<8x192xf32>
    %114 = vector.extract_strided_slice %82 {offsets = [0, 1], sizes = [8, 1], strides = [1, 1]} : vector<8x4xf32> to vector<8x1xf32>
    %115 = vector.extract_strided_slice %81 {offsets = [5, 0], sizes = [1, 192], strides = [1, 1]} : vector<8x192xf32> to vector<1x192xf32>
    %116 = vector.broadcast %114 : vector<8x1xf32> to vector<8x192xf32>
    %117 = vector.broadcast %115 : vector<1x192xf32> to vector<8x192xf32>
    %118 = arith.mulf %116, %117 : vector<8x192xf32>
    %119 = arith.addf %113, %118 : vector<8x192xf32>
    %120 = vector.extract_strided_slice %82 {offsets = [0, 2], sizes = [8, 1], strides = [1, 1]} : vector<8x4xf32> to vector<8x1xf32>
    %121 = vector.extract_strided_slice %81 {offsets = [6, 0], sizes = [1, 192], strides = [1, 1]} : vector<8x192xf32> to vector<1x192xf32>
    %122 = vector.broadcast %120 : vector<8x1xf32> to vector<8x192xf32>
    %123 = vector.broadcast %121 : vector<1x192xf32> to vector<8x192xf32>
    %124 = arith.mulf %122, %123 : vector<8x192xf32>
    %125 = arith.addf %119, %124 : vector<8x192xf32>
    %126 = vector.extract_strided_slice %82 {offsets = [0, 3], sizes = [8, 1], strides = [1, 1]} : vector<8x4xf32> to vector<8x1xf32>
    %127 = vector.extract_strided_slice %81 {offsets = [7, 0], sizes = [1, 192], strides = [1, 1]} : vector<8x192xf32> to vector<1x192xf32>
    %128 = vector.broadcast %126 : vector<8x1xf32> to vector<8x192xf32>
    %129 = vector.broadcast %127 : vector<1x192xf32> to vector<8x192xf32>
    %130 = arith.mulf %128, %129 : vector<8x192xf32>
    %131 = arith.addf %125, %130 : vector<8x192xf32>
    %132 = vector.broadcast %83 : vector<8x1xf32> to vector<8x192xf32>
    %133 = arith.addf %131, %132 : vector<8x192xf32>
    %134 = tpu.concatenate %108, %133 in 0 : vector<8x192xf32>, vector<8x192xf32> -> vector<16x192xf32>
    %c0_16 = arith.constant 0 : index
    %c0_17 = arith.constant 0 : index
    %c0_18 = arith.constant 0 : index
    %135 = vector.load %arg5[%c0_16, %c0_17, %c0_18] : memref<1x1x192xf32, #tpu.memory_space<vmem>>, vector<1x1x192xf32>
    %136 = vector.shape_cast %135 : vector<1x1x192xf32> to vector<1x192xf32>
    %137 = vector.broadcast %136 : vector<1x192xf32> to vector<16x192xf32>
    %138 = arith.mulf %134, %137 : vector<16x192xf32>
    %c0_19 = arith.constant 0 : index
    %c0_20 = arith.constant 0 : index
    %c0_21 = arith.constant 0 : index
    %139 = vector.load %arg10[%c0_19, %c0_20, %c0_21] : memref<9x16x1xf32, #tpu.memory_space<vmem>>, vector<9x16x1xf32>
    %c0_22 = arith.constant 0 : index
    %c0_23 = arith.constant 0 : index
    %140 = vector.load %arg11[%c0_22, %c0_23] : memref<16x1xf32, #tpu.memory_space<vmem>>, vector<16x1xf32>
    %141 = vector.broadcast %2 : vector<1x192xf32> to vector<16x192xf32>
    %142 = arith.mulf %138, %141 : vector<16x192xf32>
    %143 = vector.broadcast %3 : vector<1x192xf32> to vector<16x192xf32>
    %144 = arith.mulf %138, %143 : vector<16x192xf32>
    %145 = vector.extract_strided_slice %142 {offsets = [0, 175], sizes = [16, 17], strides = [1, 1]} : vector<16x192xf32> to vector<16x17xf32>
    %146 = vector.extract_strided_slice %142 {offsets = [0, 0], sizes = [16, 175], strides = [1, 1]} : vector<16x192xf32> to vector<16x175xf32>
    %147 = tpu.concatenate %145, %146 in 1 : vector<16x17xf32>, vector<16x175xf32> -> vector<16x192xf32>
    %148 = vector.extract_strided_slice %139 {offsets = [0, 0, 0], sizes = [1, 16, 1], strides = [1, 1, 1]} : vector<9x16x1xf32> to vector<1x16x1xf32>
    %149 = vector.shape_cast %148 : vector<1x16x1xf32> to vector<16x1xf32>
    %150 = vector.broadcast %149 : vector<16x1xf32> to vector<16x192xf32>
    %151 = arith.mulf %147, %150 : vector<16x192xf32>
    %152 = vector.extract_strided_slice %138 {offsets = [0, 176], sizes = [16, 16], strides = [1, 1]} : vector<16x192xf32> to vector<16x16xf32>
    %153 = vector.extract_strided_slice %138 {offsets = [0, 0], sizes = [16, 176], strides = [1, 1]} : vector<16x192xf32> to vector<16x176xf32>
    %154 = tpu.concatenate %152, %153 in 1 : vector<16x16xf32>, vector<16x176xf32> -> vector<16x192xf32>
    %155 = vector.extract_strided_slice %139 {offsets = [1, 0, 0], sizes = [1, 16, 1], strides = [1, 1, 1]} : vector<9x16x1xf32> to vector<1x16x1xf32>
    %156 = vector.shape_cast %155 : vector<1x16x1xf32> to vector<16x1xf32>
    %157 = vector.broadcast %156 : vector<16x1xf32> to vector<16x192xf32>
    %158 = arith.mulf %154, %157 : vector<16x192xf32>
    %159 = vector.extract_strided_slice %144 {offsets = [0, 177], sizes = [16, 15], strides = [1, 1]} : vector<16x192xf32> to vector<16x15xf32>
    %160 = vector.extract_strided_slice %144 {offsets = [0, 0], sizes = [16, 177], strides = [1, 1]} : vector<16x192xf32> to vector<16x177xf32>
    %161 = tpu.concatenate %159, %160 in 1 : vector<16x15xf32>, vector<16x177xf32> -> vector<16x192xf32>
    %162 = vector.extract_strided_slice %139 {offsets = [2, 0, 0], sizes = [1, 16, 1], strides = [1, 1, 1]} : vector<9x16x1xf32> to vector<1x16x1xf32>
    %163 = vector.shape_cast %162 : vector<1x16x1xf32> to vector<16x1xf32>
    %164 = vector.broadcast %163 : vector<16x1xf32> to vector<16x192xf32>
    %165 = arith.mulf %161, %164 : vector<16x192xf32>
    %166 = vector.extract_strided_slice %142 {offsets = [0, 191], sizes = [16, 1], strides = [1, 1]} : vector<16x192xf32> to vector<16x1xf32>
    %167 = vector.extract_strided_slice %142 {offsets = [0, 0], sizes = [16, 191], strides = [1, 1]} : vector<16x192xf32> to vector<16x191xf32>
    %168 = tpu.concatenate %166, %167 in 1 : vector<16x1xf32>, vector<16x191xf32> -> vector<16x192xf32>
    %169 = vector.extract_strided_slice %139 {offsets = [3, 0, 0], sizes = [1, 16, 1], strides = [1, 1, 1]} : vector<9x16x1xf32> to vector<1x16x1xf32>
    %170 = vector.shape_cast %169 : vector<1x16x1xf32> to vector<16x1xf32>
    %171 = vector.broadcast %170 : vector<16x1xf32> to vector<16x192xf32>
    %172 = arith.mulf %168, %171 : vector<16x192xf32>
    %173 = vector.extract_strided_slice %139 {offsets = [4, 0, 0], sizes = [1, 16, 1], strides = [1, 1, 1]} : vector<9x16x1xf32> to vector<1x16x1xf32>
    %174 = vector.shape_cast %173 : vector<1x16x1xf32> to vector<16x1xf32>
    %175 = vector.broadcast %174 : vector<16x1xf32> to vector<16x192xf32>
    %176 = arith.mulf %138, %175 : vector<16x192xf32>
    %177 = vector.extract_strided_slice %144 {offsets = [0, 1], sizes = [16, 191], strides = [1, 1]} : vector<16x192xf32> to vector<16x191xf32>
    %178 = vector.extract_strided_slice %144 {offsets = [0, 0], sizes = [16, 1], strides = [1, 1]} : vector<16x192xf32> to vector<16x1xf32>
    %179 = tpu.concatenate %177, %178 in 1 : vector<16x191xf32>, vector<16x1xf32> -> vector<16x192xf32>
    %180 = vector.extract_strided_slice %139 {offsets = [5, 0, 0], sizes = [1, 16, 1], strides = [1, 1, 1]} : vector<9x16x1xf32> to vector<1x16x1xf32>
    %181 = vector.shape_cast %180 : vector<1x16x1xf32> to vector<16x1xf32>
    %182 = vector.broadcast %181 : vector<16x1xf32> to vector<16x192xf32>
    %183 = arith.mulf %179, %182 : vector<16x192xf32>
    %184 = vector.extract_strided_slice %142 {offsets = [0, 15], sizes = [16, 177], strides = [1, 1]} : vector<16x192xf32> to vector<16x177xf32>
    %185 = vector.extract_strided_slice %142 {offsets = [0, 0], sizes = [16, 15], strides = [1, 1]} : vector<16x192xf32> to vector<16x15xf32>
    %186 = tpu.concatenate %184, %185 in 1 : vector<16x177xf32>, vector<16x15xf32> -> vector<16x192xf32>
    %187 = vector.extract_strided_slice %139 {offsets = [6, 0, 0], sizes = [1, 16, 1], strides = [1, 1, 1]} : vector<9x16x1xf32> to vector<1x16x1xf32>
    %188 = vector.shape_cast %187 : vector<1x16x1xf32> to vector<16x1xf32>
    %189 = vector.broadcast %188 : vector<16x1xf32> to vector<16x192xf32>
    %190 = arith.mulf %186, %189 : vector<16x192xf32>
    %191 = vector.extract_strided_slice %138 {offsets = [0, 16], sizes = [16, 176], strides = [1, 1]} : vector<16x192xf32> to vector<16x176xf32>
    %192 = vector.extract_strided_slice %138 {offsets = [0, 0], sizes = [16, 16], strides = [1, 1]} : vector<16x192xf32> to vector<16x16xf32>
    %193 = tpu.concatenate %191, %192 in 1 : vector<16x176xf32>, vector<16x16xf32> -> vector<16x192xf32>
    %194 = vector.extract_strided_slice %139 {offsets = [7, 0, 0], sizes = [1, 16, 1], strides = [1, 1, 1]} : vector<9x16x1xf32> to vector<1x16x1xf32>
    %195 = vector.shape_cast %194 : vector<1x16x1xf32> to vector<16x1xf32>
    %196 = vector.broadcast %195 : vector<16x1xf32> to vector<16x192xf32>
    %197 = arith.mulf %193, %196 : vector<16x192xf32>
    %198 = vector.extract_strided_slice %144 {offsets = [0, 17], sizes = [16, 175], strides = [1, 1]} : vector<16x192xf32> to vector<16x175xf32>
    %199 = vector.extract_strided_slice %144 {offsets = [0, 0], sizes = [16, 17], strides = [1, 1]} : vector<16x192xf32> to vector<16x17xf32>
    %200 = tpu.concatenate %198, %199 in 1 : vector<16x175xf32>, vector<16x17xf32> -> vector<16x192xf32>
    %201 = vector.extract_strided_slice %139 {offsets = [8, 0, 0], sizes = [1, 16, 1], strides = [1, 1, 1]} : vector<9x16x1xf32> to vector<1x16x1xf32>
    %202 = vector.shape_cast %201 : vector<1x16x1xf32> to vector<16x1xf32>
    %203 = vector.broadcast %202 : vector<16x1xf32> to vector<16x192xf32>
    %204 = arith.mulf %200, %203 : vector<16x192xf32>
    %205 = arith.addf %151, %158 : vector<16x192xf32>
    %206 = arith.addf %165, %172 : vector<16x192xf32>
    %207 = arith.addf %176, %183 : vector<16x192xf32>
    %208 = arith.addf %190, %197 : vector<16x192xf32>
    %209 = arith.addf %205, %206 : vector<16x192xf32>
    %210 = arith.addf %207, %208 : vector<16x192xf32>
    %211 = arith.addf %209, %210 : vector<16x192xf32>
    %212 = arith.addf %211, %204 : vector<16x192xf32>
    %213 = vector.broadcast %140 : vector<16x1xf32> to vector<16x192xf32>
    %214 = arith.addf %212, %213 : vector<16x192xf32>
    %cst_24 = arith.constant 0.000000e+00 : f32
    %215 = vector.broadcast %cst_24 : f32 to vector<16x192xf32>
    %216 = arith.maximumf %214, %215 : vector<16x192xf32>
    %c0_25 = arith.constant 0 : index
    %c0_26 = arith.constant 0 : index
    %217 = vector.load %arg12[%c0_25, %c0_26] : memref<8x8xf32, #tpu.memory_space<vmem>>, vector<8x8xf32>
    %c0_27 = arith.constant 0 : index
    %c0_28 = arith.constant 0 : index
    %218 = vector.load %arg13[%c0_27, %c0_28] : memref<8x1xf32, #tpu.memory_space<vmem>>, vector<8x1xf32>
    %219 = vector.extract_strided_slice %217 {offsets = [0, 0], sizes = [8, 1], strides = [1, 1]} : vector<8x8xf32> to vector<8x1xf32>
    %220 = vector.extract_strided_slice %216 {offsets = [0, 0], sizes = [1, 192], strides = [1, 1]} : vector<16x192xf32> to vector<1x192xf32>
    %221 = vector.broadcast %219 : vector<8x1xf32> to vector<8x192xf32>
    %222 = vector.broadcast %220 : vector<1x192xf32> to vector<8x192xf32>
    %223 = arith.mulf %221, %222 : vector<8x192xf32>
    %224 = vector.extract_strided_slice %217 {offsets = [0, 1], sizes = [8, 1], strides = [1, 1]} : vector<8x8xf32> to vector<8x1xf32>
    %225 = vector.extract_strided_slice %216 {offsets = [1, 0], sizes = [1, 192], strides = [1, 1]} : vector<16x192xf32> to vector<1x192xf32>
    %226 = vector.broadcast %224 : vector<8x1xf32> to vector<8x192xf32>
    %227 = vector.broadcast %225 : vector<1x192xf32> to vector<8x192xf32>
    %228 = arith.mulf %226, %227 : vector<8x192xf32>
    %229 = arith.addf %223, %228 : vector<8x192xf32>
    %230 = vector.extract_strided_slice %217 {offsets = [0, 2], sizes = [8, 1], strides = [1, 1]} : vector<8x8xf32> to vector<8x1xf32>
    %231 = vector.extract_strided_slice %216 {offsets = [2, 0], sizes = [1, 192], strides = [1, 1]} : vector<16x192xf32> to vector<1x192xf32>
    %232 = vector.broadcast %230 : vector<8x1xf32> to vector<8x192xf32>
    %233 = vector.broadcast %231 : vector<1x192xf32> to vector<8x192xf32>
    %234 = arith.mulf %232, %233 : vector<8x192xf32>
    %235 = arith.addf %229, %234 : vector<8x192xf32>
    %236 = vector.extract_strided_slice %217 {offsets = [0, 3], sizes = [8, 1], strides = [1, 1]} : vector<8x8xf32> to vector<8x1xf32>
    %237 = vector.extract_strided_slice %216 {offsets = [3, 0], sizes = [1, 192], strides = [1, 1]} : vector<16x192xf32> to vector<1x192xf32>
    %238 = vector.broadcast %236 : vector<8x1xf32> to vector<8x192xf32>
    %239 = vector.broadcast %237 : vector<1x192xf32> to vector<8x192xf32>
    %240 = arith.mulf %238, %239 : vector<8x192xf32>
    %241 = arith.addf %235, %240 : vector<8x192xf32>
    %242 = vector.extract_strided_slice %217 {offsets = [0, 4], sizes = [8, 1], strides = [1, 1]} : vector<8x8xf32> to vector<8x1xf32>
    %243 = vector.extract_strided_slice %216 {offsets = [4, 0], sizes = [1, 192], strides = [1, 1]} : vector<16x192xf32> to vector<1x192xf32>
    %244 = vector.broadcast %242 : vector<8x1xf32> to vector<8x192xf32>
    %245 = vector.broadcast %243 : vector<1x192xf32> to vector<8x192xf32>
    %246 = arith.mulf %244, %245 : vector<8x192xf32>
    %247 = arith.addf %241, %246 : vector<8x192xf32>
    %248 = vector.extract_strided_slice %217 {offsets = [0, 5], sizes = [8, 1], strides = [1, 1]} : vector<8x8xf32> to vector<8x1xf32>
    %249 = vector.extract_strided_slice %216 {offsets = [5, 0], sizes = [1, 192], strides = [1, 1]} : vector<16x192xf32> to vector<1x192xf32>
    %250 = vector.broadcast %248 : vector<8x1xf32> to vector<8x192xf32>
    %251 = vector.broadcast %249 : vector<1x192xf32> to vector<8x192xf32>
    %252 = arith.mulf %250, %251 : vector<8x192xf32>
    %253 = arith.addf %247, %252 : vector<8x192xf32>
    %254 = vector.extract_strided_slice %217 {offsets = [0, 6], sizes = [8, 1], strides = [1, 1]} : vector<8x8xf32> to vector<8x1xf32>
    %255 = vector.extract_strided_slice %216 {offsets = [6, 0], sizes = [1, 192], strides = [1, 1]} : vector<16x192xf32> to vector<1x192xf32>
    %256 = vector.broadcast %254 : vector<8x1xf32> to vector<8x192xf32>
    %257 = vector.broadcast %255 : vector<1x192xf32> to vector<8x192xf32>
    %258 = arith.mulf %256, %257 : vector<8x192xf32>
    %259 = arith.addf %253, %258 : vector<8x192xf32>
    %260 = vector.extract_strided_slice %217 {offsets = [0, 7], sizes = [8, 1], strides = [1, 1]} : vector<8x8xf32> to vector<8x1xf32>
    %261 = vector.extract_strided_slice %216 {offsets = [7, 0], sizes = [1, 192], strides = [1, 1]} : vector<16x192xf32> to vector<1x192xf32>
    %262 = vector.broadcast %260 : vector<8x1xf32> to vector<8x192xf32>
    %263 = vector.broadcast %261 : vector<1x192xf32> to vector<8x192xf32>
    %264 = arith.mulf %262, %263 : vector<8x192xf32>
    %265 = arith.addf %259, %264 : vector<8x192xf32>
    %266 = vector.broadcast %218 : vector<8x1xf32> to vector<8x192xf32>
    %267 = arith.addf %265, %266 : vector<8x192xf32>
    %268 = vector.extract_strided_slice %217 {offsets = [0, 0], sizes = [8, 1], strides = [1, 1]} : vector<8x8xf32> to vector<8x1xf32>
    %269 = vector.extract_strided_slice %216 {offsets = [8, 0], sizes = [1, 192], strides = [1, 1]} : vector<16x192xf32> to vector<1x192xf32>
    %270 = vector.broadcast %268 : vector<8x1xf32> to vector<8x192xf32>
    %271 = vector.broadcast %269 : vector<1x192xf32> to vector<8x192xf32>
    %272 = arith.mulf %270, %271 : vector<8x192xf32>
    %273 = vector.extract_strided_slice %217 {offsets = [0, 1], sizes = [8, 1], strides = [1, 1]} : vector<8x8xf32> to vector<8x1xf32>
    %274 = vector.extract_strided_slice %216 {offsets = [9, 0], sizes = [1, 192], strides = [1, 1]} : vector<16x192xf32> to vector<1x192xf32>
    %275 = vector.broadcast %273 : vector<8x1xf32> to vector<8x192xf32>
    %276 = vector.broadcast %274 : vector<1x192xf32> to vector<8x192xf32>
    %277 = arith.mulf %275, %276 : vector<8x192xf32>
    %278 = arith.addf %272, %277 : vector<8x192xf32>
    %279 = vector.extract_strided_slice %217 {offsets = [0, 2], sizes = [8, 1], strides = [1, 1]} : vector<8x8xf32> to vector<8x1xf32>
    %280 = vector.extract_strided_slice %216 {offsets = [10, 0], sizes = [1, 192], strides = [1, 1]} : vector<16x192xf32> to vector<1x192xf32>
    %281 = vector.broadcast %279 : vector<8x1xf32> to vector<8x192xf32>
    %282 = vector.broadcast %280 : vector<1x192xf32> to vector<8x192xf32>
    %283 = arith.mulf %281, %282 : vector<8x192xf32>
    %284 = arith.addf %278, %283 : vector<8x192xf32>
    %285 = vector.extract_strided_slice %217 {offsets = [0, 3], sizes = [8, 1], strides = [1, 1]} : vector<8x8xf32> to vector<8x1xf32>
    %286 = vector.extract_strided_slice %216 {offsets = [11, 0], sizes = [1, 192], strides = [1, 1]} : vector<16x192xf32> to vector<1x192xf32>
    %287 = vector.broadcast %285 : vector<8x1xf32> to vector<8x192xf32>
    %288 = vector.broadcast %286 : vector<1x192xf32> to vector<8x192xf32>
    %289 = arith.mulf %287, %288 : vector<8x192xf32>
    %290 = arith.addf %284, %289 : vector<8x192xf32>
    %291 = vector.extract_strided_slice %217 {offsets = [0, 4], sizes = [8, 1], strides = [1, 1]} : vector<8x8xf32> to vector<8x1xf32>
    %292 = vector.extract_strided_slice %216 {offsets = [12, 0], sizes = [1, 192], strides = [1, 1]} : vector<16x192xf32> to vector<1x192xf32>
    %293 = vector.broadcast %291 : vector<8x1xf32> to vector<8x192xf32>
    %294 = vector.broadcast %292 : vector<1x192xf32> to vector<8x192xf32>
    %295 = arith.mulf %293, %294 : vector<8x192xf32>
    %296 = arith.addf %290, %295 : vector<8x192xf32>
    %297 = vector.extract_strided_slice %217 {offsets = [0, 5], sizes = [8, 1], strides = [1, 1]} : vector<8x8xf32> to vector<8x1xf32>
    %298 = vector.extract_strided_slice %216 {offsets = [13, 0], sizes = [1, 192], strides = [1, 1]} : vector<16x192xf32> to vector<1x192xf32>
    %299 = vector.broadcast %297 : vector<8x1xf32> to vector<8x192xf32>
    %300 = vector.broadcast %298 : vector<1x192xf32> to vector<8x192xf32>
    %301 = arith.mulf %299, %300 : vector<8x192xf32>
    %302 = arith.addf %296, %301 : vector<8x192xf32>
    %303 = vector.extract_strided_slice %217 {offsets = [0, 6], sizes = [8, 1], strides = [1, 1]} : vector<8x8xf32> to vector<8x1xf32>
    %304 = vector.extract_strided_slice %216 {offsets = [14, 0], sizes = [1, 192], strides = [1, 1]} : vector<16x192xf32> to vector<1x192xf32>
    %305 = vector.broadcast %303 : vector<8x1xf32> to vector<8x192xf32>
    %306 = vector.broadcast %304 : vector<1x192xf32> to vector<8x192xf32>
    %307 = arith.mulf %305, %306 : vector<8x192xf32>
    %308 = arith.addf %302, %307 : vector<8x192xf32>
    %309 = vector.extract_strided_slice %217 {offsets = [0, 7], sizes = [8, 1], strides = [1, 1]} : vector<8x8xf32> to vector<8x1xf32>
    %310 = vector.extract_strided_slice %216 {offsets = [15, 0], sizes = [1, 192], strides = [1, 1]} : vector<16x192xf32> to vector<1x192xf32>
    %311 = vector.broadcast %309 : vector<8x1xf32> to vector<8x192xf32>
    %312 = vector.broadcast %310 : vector<1x192xf32> to vector<8x192xf32>
    %313 = arith.mulf %311, %312 : vector<8x192xf32>
    %314 = arith.addf %308, %313 : vector<8x192xf32>
    %315 = vector.broadcast %218 : vector<8x1xf32> to vector<8x192xf32>
    %316 = arith.addf %314, %315 : vector<8x192xf32>
    %317 = tpu.concatenate %267, %316 in 0 : vector<8x192xf32>, vector<8x192xf32> -> vector<16x192xf32>
    %318 = vector.extract_strided_slice %317 {offsets = [0, 32], sizes = [16, 128], strides = [1, 1]} : vector<16x192xf32> to vector<16x128xf32>
    %c0_29 = arith.constant 0 : index
    %c0_30 = arith.constant 0 : index
    %c0_31 = arith.constant 0 : index
    %c0_32 = arith.constant 0 : index
    %319 = vector.load %arg14[%c0_29, %c0_30, %c0_31, %c0_32] : memref<1x1x16x128xf32, #tpu.memory_space<vmem>>, vector<1x1x16x128xf32>
    %320 = vector.shape_cast %319 : vector<1x1x16x128xf32> to vector<16x128xf32>
    %321 = vector.shape_cast %318 : vector<16x128xf32> to vector<1x1x16x128xf32>
    tpu.vector_store %arg14[%c0_29, %c0_30, %c0_31, %c0_32], %321 {strides = array<i32>} : memref<1x1x16x128xf32, #tpu.memory_space<vmem>>, vector<1x1x16x128xf32>,
    return
  }
  func.func @transform_0(%arg0: i32, %arg1: i32) -> (i32, i32, i32, i32) {
    %c0_i32 = arith.constant 0 : i32
    %c0_i32_0 = arith.constant 0 : i32
    %c0_i32_1 = arith.constant 0 : i32
    return %arg0, %arg1, %c0_i32, %c0_i32_0 : i32, i32, i32, i32
  }
  func.func @transform_1(%arg0: i32, %arg1: i32) -> (i32, i32) {
    %c0_i32 = arith.constant 0 : i32
    %c0_i32_0 = arith.constant 0 : i32
    %c0_i32_1 = arith.constant 0 : i32
    return %c0_i32, %c0_i32_0 : i32, i32
  }
  func.func @transform_2(%arg0: i32, %arg1: i32) -> (i32, i32) {
    %c0_i32 = arith.constant 0 : i32
    %c0_i32_0 = arith.constant 0 : i32
    %c0_i32_1 = arith.constant 0 : i32
    return %c0_i32, %c0_i32_0 : i32, i32
  }
  func.func @transform_3(%arg0: i32, %arg1: i32) -> (i32, i32, i32) {
    %c0_i32 = arith.constant 0 : i32
    %c0_i32_0 = arith.constant 0 : i32
    %c0_i32_1 = arith.constant 0 : i32
    return %arg1, %c0_i32, %c0_i32_0 : i32, i32, i32
  }
  func.func @transform_4(%arg0: i32, %arg1: i32) -> (i32, i32, i32) {
    %c0_i32 = arith.constant 0 : i32
    %c0_i32_0 = arith.constant 0 : i32
    %c0_i32_1 = arith.constant 0 : i32
    %c0_i32_2 = arith.constant 0 : i32
    return %c0_i32, %c0_i32_0, %c0_i32_1 : i32, i32, i32
  }
  func.func @transform_5(%arg0: i32, %arg1: i32) -> (i32, i32) {
    %c0_i32 = arith.constant 0 : i32
    %c0_i32_0 = arith.constant 0 : i32
    %c0_i32_1 = arith.constant 0 : i32
    return %c0_i32, %c0_i32_0 : i32, i32
  }
  func.func @transform_6(%arg0: i32, %arg1: i32) -> (i32, i32) {
    %c0_i32 = arith.constant 0 : i32
    %c0_i32_0 = arith.constant 0 : i32
    %c0_i32_1 = arith.constant 0 : i32
    return %c0_i32, %c0_i32_0 : i32, i32
  }
  func.func @transform_7(%arg0: i32, %arg1: i32) -> (i32, i32) {
    %c0_i32 = arith.constant 0 : i32
    %c0_i32_0 = arith.constant 0 : i32
    %c0_i32_1 = arith.constant 0 : i32
    return %c0_i32, %c0_i32_0 : i32, i32
  }
  func.func @transform_8(%arg0: i32, %arg1: i32) -> (i32, i32, i32) {
    %c0_i32 = arith.constant 0 : i32
    %c0_i32_0 = arith.constant 0 : i32
    %c0_i32_1 = arith.constant 0 : i32
    %c0_i32_2 = arith.constant 0 : i32
    return %c0_i32, %c0_i32_0, %c0_i32_1 : i32, i32, i32
  }
  func.func @transform_9(%arg0: i32, %arg1: i32) -> (i32, i32) {
    %c0_i32 = arith.constant 0 : i32
    %c0_i32_0 = arith.constant 0 : i32
    %c0_i32_1 = arith.constant 0 : i32
    return %c0_i32, %c0_i32_0 : i32, i32
  }
  func.func @transform_10(%arg0: i32, %arg1: i32) -> (i32, i32) {
    %c0_i32 = arith.constant 0 : i32
    %c0_i32_0 = arith.constant 0 : i32
    %c0_i32_1 = arith.constant 0 : i32
    return %c0_i32, %c0_i32_0 : i32, i32
  }
  func.func @transform_11(%arg0: i32, %arg1: i32) -> (i32, i32) {
    %c0_i32 = arith.constant 0 : i32
    %c0_i32_0 = arith.constant 0 : i32
    %c0_i32_1 = arith.constant 0 : i32
    return %c0_i32, %c0_i32_0 : i32, i32
  }
  func.func @transform_12(%arg0: i32, %arg1: i32) -> (i32, i32, i32, i32) {
    %c0_i32 = arith.constant 0 : i32
    %c0_i32_0 = arith.constant 0 : i32
    %c0_i32_1 = arith.constant 0 : i32
    return %arg0, %arg1, %c0_i32, %c0_i32_0 : i32, i32, i32, i32
  }
}

</mosaic_0001>

<llo_original>
// kernel: tpu_custom_call.1
$region0: #{tpu_custom_call.1}
  #allocation0 [shape = 'u32[]', space=smem, size = 0x4, offset = 0x4, fixed_abs, tag = 'smem constant byte address 0x4 - core index']
  #allocation1 [shape = 'u32[72,128]{1,0:T(1,128)}', space=vmem, size = 0x9000, scoped, tag = 'internal scratch']
  %s0 = inlined_call_operand.vmem [shape: f32[1,2,8,192], index: 0, kind: input, shape index: {}]
  %s1 = inlined_call_operand.vmem [shape: f32[1,192], index: 1, kind: input, shape index: {}]
  %s2 = inlined_call_operand.vmem [shape: f32[1,192], index: 2, kind: input, shape index: {}]
  %s3 = inlined_call_operand.vmem [shape: f32[2,1,192], index: 3, kind: input, shape index: {}]
  %s4 = inlined_call_operand.vmem [shape: f32[9,8,1], index: 4, kind: input, shape index: {}]
  %s5 = inlined_call_operand.vmem [shape: f32[8,1], index: 5, kind: input, shape index: {}]
  %s6 = inlined_call_operand.vmem [shape: f32[8,4], index: 6, kind: input, shape index: {}]
  %s7 = inlined_call_operand.vmem [shape: f32[8,1], index: 7, kind: input, shape index: {}]
  %s8 = inlined_call_operand.vmem [shape: f32[9,16,1], index: 8, kind: input, shape index: {}]
  %s9 = inlined_call_operand.vmem [shape: f32[16,1], index: 9, kind: input, shape index: {}]
  %s10 = inlined_call_operand.vmem [shape: f32[8,8], index: 10, kind: input, shape index: {}]
  %s11 = inlined_call_operand.vmem [shape: f32[8,1], index: 11, kind: input, shape index: {}]
  %s12 = inlined_call_operand.hbm [shape: f32[1,2,16,128], index: 12, kind: output, shape index: {}]
  %s13 = sld [smem:[#allocation0]]
  $region81: #{tpu_custom_call.1} parent=0
    _
  %s15 = ssub.s32 1, %s13
  %s16 = scalar_select 0, %s15, %s13
  $region1: #{tpu_custom_call.1} parent=0
    #allocation2 [shape = 'u8[16384]{0}', space=vmem, size = 0x4000, scoped, tag = 'output window, operand 0']
    #allocation3 [shape = 's32[2]{0}', space=sflag, size = 0x8, scoped, tag = 'scoped memory for tpu_custom_call.1']
    %17 = vsyncpa [#allocation3], 0
    %s18 = scalar_lea.sflag [#allocation3], 1
    %19 = vsyncpa %s18, 0
    loop: start=0, step=1, limit=4
    $region2: #{tpu_custom_call.1} parent=1 // loop_pre_header
      _
    $region3: #{tpu_custom_call.1} parent=1 // loop_header
      %s21 = sphi 0, %s25
      %p22 = scmp.ge.s32.totalorder %s21, 4
      %s28 = sphi 0, %s40
      %s29 = sphi 0, %s36
      %s30 = sphi 0, %s28
      %s31 = sphi 0, %s29
      %s32 = sphi 0, %s30
      %s33 = sphi 0, %s31
      %s45 = sphi 0, %s47
      %s48 = sphi 0, %s45
      %s49 = sphi 0, %s48
      %s65 = sphi 0, %s49
      %s69 = sphi 0, %s69
      %s71 = sphi 0, %s69
      %s72 = sphi 0, %s71
      %s86 = sphi 0, %s72
      %s90 = sphi 0, %s90
      %s92 = sphi 0, %s90
      %s93 = sphi 0, %s92
      %s107 = sphi 0, %s93
      %s113 = sphi 0, %s115
      %s116 = sphi 0, %s113
      %s117 = sphi 0, %s116
      %s133 = sphi 0, %s117
      %s137 = sphi 0, %s137
      %s139 = sphi 0, %s137
      %s140 = sphi 0, %s139
      %s154 = sphi 0, %s140
      %s158 = sphi 0, %s158
      %s160 = sphi 0, %s158
      %s161 = sphi 0, %s160
      %s175 = sphi 0, %s161
      %s179 = sphi 0, %s179
      %s181 = sphi 0, %s179
      %s182 = sphi 0, %s181
      %s196 = sphi 0, %s182
      %s200 = sphi 0, %s200
      %s202 = sphi 0, %s200
      %s203 = sphi 0, %s202
      %s217 = sphi 0, %s203
      %s221 = sphi 0, %s221
      %s223 = sphi 0, %s221
      %s224 = sphi 0, %s223
      %s238 = sphi 0, %s224
      %s242 = sphi 0, %s242
      %s244 = sphi 0, %s242
      %s245 = sphi 0, %s244
      %s259 = sphi 0, %s245
      %s263 = sphi 0, %s263
      %s265 = sphi 0, %s263
      %s266 = sphi 0, %s265
      %s280 = sphi 0, %s266
      %s284 = sphi 0, %s284
      %s286 = sphi 0, %s284
      %s287 = sphi 0, %s286
      %s301 = sphi 0, %s287
      %s309 = sphi 0, %s311
      %s312 = sphi 0, %s309
      %s313 = sphi 0, %s312
      %s329 = sphi 0, %s313
    $region4: #{tpu_custom_call.1} parent=1 // loop_header_branch
      %24 = sbr.rel (%p22) target = $region8
    $region5: #{tpu_custom_call.1} parent=1 // loop_body
      %s26 = ssub.s32 %s21, 1
      %s27 = ssub.s32 %s21, 2
      %s34 = sadd.s32 1, %s29
      %p35 = scmp.ge.s32.totalorder %s34, 2
      %s36 = scalar_select %p35, 0, %s34
      %s37 = sadd.s32 1, %s28
      %s38 = scalar_select %p35, %s37, %s28
      %p39 = scmp.ge.s32.totalorder %s38, 1
      %s40 = scalar_select %p39, 0, %s38
      %s41 = ssub.s32 %s28, %s40
      %s42 = ssub.s32 %s29, %s36
      %s43 = sor.u32 %s41, %s42
      %p44 = scmp.eq.s32.totalorder %s43, 0
      %s46 = sadd.s32 %s45, 1
      %s47 = scalar_select %p44, %s45, %s46
      %p50 = pneg %p44
      %p51 = scmp.eq.s32.totalorder %s21, 1
      %p52 = por %p50, %p51
      %p53 = scmp.ne.s32.totalorder %s45, %s48
      %p54 = scmp.eq.s32.totalorder %s21, 0
      %p55 = por %p53, %p54
      %p56 = scmp.ne.s32.totalorder %s45, %s48
      %p57 = scmp.eq.s32.totalorder %s26, 1
      %p58 = por %p56, %p57
      %p59 = scmp.ne.s32.totalorder %s48, %s49
      %p60 = scmp.eq.s32.totalorder %s26, 0
      %p61 = por %p59, %p60
      %p62 = scmp.ne.s32.totalorder %s48, %s49
      %p63 = scmp.eq.s32.totalorder %s27, 1
      %p64 = por %p62, %p63
      %p66 = scmp.ne.s32.totalorder %s49, %s65
      %p67 = scmp.eq.s32.totalorder %s27, 0
      %p68 = por %p66, %p67
      %s70 = sadd.s32 %s69, 1
      %p73 = scmp.eq.s32.totalorder %s21, 1
      %p74 = scmp.ne.s32.totalorder %s69, %s71
      %p75 = scmp.eq.s32.totalorder %s21, 0
      %p76 = por %p74, %p75
      %p77 = scmp.ne.s32.totalorder %s69, %s71
      %p78 = scmp.eq.s32.totalorder %s26, 1
      %p79 = por %p77, %p78
      %p80 = scmp.ne.s32.totalorder %s71, %s72
      %p81 = scmp.eq.s32.totalorder %s26, 0
      %p82 = por %p80, %p81
      %p83 = scmp.ne.s32.totalorder %s71, %s72
      %p84 = scmp.eq.s32.totalorder %s27, 1
      %p85 = por %p83, %p84
      %p87 = scmp.ne.s32.totalorder %s72, %s86
      %p88 = scmp.eq.s32.totalorder %s27, 0
      %p89 = por %p87, %p88
      %s91 = sadd.s32 %s90, 1
      %p94 = scmp.eq.s32.totalorder %s21, 1
      %p95 = scmp.ne.s32.totalorder %s90, %s92
      %p96 = scmp.eq.s32.totalorder %s21, 0
      %p97 = por %p95, %p96
      %p98 = scmp.ne.s32.totalorder %s90, %s92
      %p99 = scmp.eq.s32.totalorder %s26, 1
      %p100 = por %p98, %p99
      %p101 = scmp.ne.s32.totalorder %s92, %s93
      %p102 = scmp.eq.s32.totalorder %s26, 0
      %p103 = por %p101, %p102
      %p104 = scmp.ne.s32.totalorder %s92, %s93
      %p105 = scmp.eq.s32.totalorder %s27, 1
      %p106 = por %p104, %p105
      %p108 = scmp.ne.s32.totalorder %s93, %s107
      %p109 = scmp.eq.s32.totalorder %s27, 0
      %p110 = por %p108, %p109
      %s111 = ssub.s32 %s29, %s36
      %p112 = scmp.eq.s32.totalorder %s111, 0
      %s114 = sadd.s32 %s113, 1
      %s115 = scalar_select %p112, %s113, %s114
      %p118 = pneg %p112
      %p119 = scmp.eq.s32.totalorder %s21, 1
      %p120 = por %p118, %p119
      %p121 = scmp.ne.s32.totalorder %s113, %s116
      %p122 = scmp.eq.s32.totalorder %s21, 0
      %p123 = por %p121, %p122
      %p124 = scmp.ne.s32.totalorder %s113, %s116
      %p125 = scmp.eq.s32.totalorder %s26, 1
      %p126 = por %p124, %p125
      %p127 = scmp.ne.s32.totalorder %s116, %s117
      %p128 = scmp.eq.s32.totalorder %s26, 0
      %p129 = por %p127, %p128
      %p130 = scmp.ne.s32.totalorder %s116, %s117
      %p131 = scmp.eq.s32.totalorder %s27, 1
      %p132 = por %p130, %p131
      %p134 = scmp.ne.s32.totalorder %s117, %s133
      %p135 = scmp.eq.s32.totalorder %s27, 0
      %p136 = por %p134, %p135
      %s138 = sadd.s32 %s137, 1
      %p141 = scmp.eq.s32.totalorder %s21, 1
      %p142 = scmp.ne.s32.totalorder %s137, %s139
      %p143 = scmp.eq.s32.totalorder %s21, 0
      %p144 = por %p142, %p143
      %p145 = scmp.ne.s32.totalorder %s137, %s139
      %p146 = scmp.eq.s32.totalorder %s26, 1
      %p147 = por %p145, %p146
      %p148 = scmp.ne.s32.totalorder %s139, %s140
      %p149 = scmp.eq.s32.totalorder %s26, 0
      %p150 = por %p148, %p149
      %p151 = scmp.ne.s32.totalorder %s139, %s140
      %p152 = scmp.eq.s32.totalorder %s27, 1
      %p153 = por %p151, %p152
      %p155 = scmp.ne.s32.totalorder %s140, %s154
      %p156 = scmp.eq.s32.totalorder %s27, 0
      %p157 = por %p155, %p156
      %s159 = sadd.s32 %s158, 1
      %p162 = scmp.eq.s32.totalorder %s21, 1
      %p163 = scmp.ne.s32.totalorder %s158, %s160
      %p164 = scmp.eq.s32.totalorder %s21, 0
      %p165 = por %p163, %p164
      %p166 = scmp.ne.s32.totalorder %s158, %s160
      %p167 = scmp.eq.s32.totalorder %s26, 1
      %p168 = por %p166, %p167
      %p169 = scmp.ne.s32.totalorder %s160, %s161
      %p170 = scmp.eq.s32.totalorder %s26, 0
      %p171 = por %p169, %p170
      %p172 = scmp.ne.s32.totalorder %s160, %s161
      %p173 = scmp.eq.s32.totalorder %s27, 1
      %p174 = por %p172, %p173
      %p176 = scmp.ne.s32.totalorder %s161, %s175
      %p177 = scmp.eq.s32.totalorder %s27, 0
      %p178 = por %p176, %p177
      %s180 = sadd.s32 %s179, 1
      %p183 = scmp.eq.s32.totalorder %s21, 1
      %p184 = scmp.ne.s32.totalorder %s179, %s181
      %p185 = scmp.eq.s32.totalorder %s21, 0
      %p186 = por %p184, %p185
      %p187 = scmp.ne.s32.totalorder %s179, %s181
      %p188 = scmp.eq.s32.totalorder %s26, 1
      %p189 = por %p187, %p188
      %p190 = scmp.ne.s32.totalorder %s181, %s182
      %p191 = scmp.eq.s32.totalorder %s26, 0
      %p192 = por %p190, %p191
      %p193 = scmp.ne.s32.totalorder %s181, %s182
      %p194 = scmp.eq.s32.totalorder %s27, 1
      %p195 = por %p193, %p194
      %p197 = scmp.ne.s32.totalorder %s182, %s196
      %p198 = scmp.eq.s32.totalorder %s27, 0
      %p199 = por %p197, %p198
      %s201 = sadd.s32 %s200, 1
      %p204 = scmp.eq.s32.totalorder %s21, 1
      %p205 = scmp.ne.s32.totalorder %s200, %s202
      %p206 = scmp.eq.s32.totalorder %s21, 0
      %p207 = por %p205, %p206
      %p208 = scmp.ne.s32.totalorder %s200, %s202
      %p209 = scmp.eq.s32.totalorder %s26, 1
      %p210 = por %p208, %p209
      %p211 = scmp.ne.s32.totalorder %s202, %s203
      %p212 = scmp.eq.s32.totalorder %s26, 0
      %p213 = por %p211, %p212
      %p214 = scmp.ne.s32.totalorder %s202, %s203
      %p215 = scmp.eq.s32.totalorder %s27, 1
      %p216 = por %p214, %p215
      %p218 = scmp.ne.s32.totalorder %s203, %s217
      %p219 = scmp.eq.s32.totalorder %s27, 0
      %p220 = por %p218, %p219
      %s222 = sadd.s32 %s221, 1
      %p225 = scmp.eq.s32.totalorder %s21, 1
      %p226 = scmp.ne.s32.totalorder %s221, %s223
      %p227 = scmp.eq.s32.totalorder %s21, 0
      %p228 = por %p226, %p227
      %p229 = scmp.ne.s32.totalorder %s221, %s223
      %p230 = scmp.eq.s32.totalorder %s26, 1
      %p231 = por %p229, %p230
      %p232 = scmp.ne.s32.totalorder %s223, %s224
      %p233 = scmp.eq.s32.totalorder %s26, 0
      %p234 = por %p232, %p233
      %p235 = scmp.ne.s32.totalorder %s223, %s224
      %p236 = scmp.eq.s32.totalorder %s27, 1
      %p237 = por %p235, %p236
      %p239 = scmp.ne.s32.totalorder %s224, %s238
      %p240 = scmp.eq.s32.totalorder %s27, 0
      %p241 = por %p239, %p240
      %s243 = sadd.s32 %s242, 1
      %p246 = scmp.eq.s32.totalorder %s21, 1
      %p247 = scmp.ne.s32.totalorder %s242, %s244
      %p248 = scmp.eq.s32.totalorder %s21, 0
      %p249 = por %p247, %p248
      %p250 = scmp.ne.s32.totalorder %s242, %s244
      %p251 = scmp.eq.s32.totalorder %s26, 1
      %p252 = por %p250, %p251
      %p253 = scmp.ne.s32.totalorder %s244, %s245
      %p254 = scmp.eq.s32.totalorder %s26, 0
      %p255 = por %p253, %p254
      %p256 = scmp.ne.s32.totalorder %s244, %s245
      %p257 = scmp.eq.s32.totalorder %s27, 1
      %p258 = por %p256, %p257
      %p260 = scmp.ne.s32.totalorder %s245, %s259
      %p261 = scmp.eq.s32.totalorder %s27, 0
      %p262 = por %p260, %p261
      %s264 = sadd.s32 %s263, 1
      %p267 = scmp.eq.s32.totalorder %s21, 1
      %p268 = scmp.ne.s32.totalorder %s263, %s265
      %p269 = scmp.eq.s32.totalorder %s21, 0
      %p270 = por %p268, %p269
      %p271 = scmp.ne.s32.totalorder %s263, %s265
      %p272 = scmp.eq.s32.totalorder %s26, 1
      %p273 = por %p271, %p272
      %p274 = scmp.ne.s32.totalorder %s265, %s266
      %p275 = scmp.eq.s32.totalorder %s26, 0
      %p276 = por %p274, %p275
      %p277 = scmp.ne.s32.totalorder %s265, %s266
      %p278 = scmp.eq.s32.totalorder %s27, 1
      %p279 = por %p277, %p278
      %p281 = scmp.ne.s32.totalorder %s266, %s280
      %p282 = scmp.eq.s32.totalorder %s27, 0
      %p283 = por %p281, %p282
      %s285 = sadd.s32 %s284, 1
      %p288 = scmp.eq.s32.totalorder %s21, 1
      %p289 = scmp.ne.s32.totalorder %s284, %s286
      %p290 = scmp.eq.s32.totalorder %s21, 0
      %p291 = por %p289, %p290
      %p292 = scmp.ne.s32.totalorder %s284, %s286
      %p293 = scmp.eq.s32.totalorder %s26, 1
      %p294 = por %p292, %p293
      %p295 = scmp.ne.s32.totalorder %s286, %s287
      %p296 = scmp.eq.s32.totalorder %s26, 0
      %p297 = por %p295, %p296
      %p298 = scmp.ne.s32.totalorder %s286, %s287
      %p299 = scmp.eq.s32.totalorder %s27, 1
      %p300 = por %p298, %p299
      %p302 = scmp.ne.s32.totalorder %s287, %s301
      %p303 = scmp.eq.s32.totalorder %s27, 0
      %p304 = por %p302, %p303
      %s305 = ssub.s32 %s28, %s40
      %s306 = ssub.s32 %s29, %s36
      %s307 = sor.u32 %s305, %s306
      %p308 = scmp.eq.s32.totalorder %s307, 0
      %s310 = sadd.s32 %s309, 1
      %s311 = scalar_select %p308, %s309, %s310
      %p314 = pneg %p308
      %p315 = scmp.eq.s32.totalorder %s21, 1
      %p316 = por %p314, %p315
      %p317 = scmp.ne.s32.totalorder %s309, %s312
      %p318 = scmp.eq.s32.totalorder %s21, 0
      %p319 = por %p317, %p318
      %p320 = scmp.ne.s32.totalorder %s309, %s312
      %p321 = scmp.eq.s32.totalorder %s26, 1
      %p322 = por %p320, %p321
      %p323 = scmp.ne.s32.totalorder %s312, %s313
      %p324 = scmp.eq.s32.totalorder %s26, 0
      %p325 = por %p323, %p324
      %p326 = scmp.ne.s32.totalorder %s312, %s313
      %p327 = scmp.eq.s32.totalorder %s27, 1
      %p328 = por %p326, %p327
      %p330 = scmp.ne.s32.totalorder %s313, %s329
      %p331 = scmp.eq.s32.totalorder %s27, 0
      %p332 = por %p330, %p331
      %p333 = scmp.le.s32.totalorder 1, %s21
      %p334 = scmp.lt.s32.totalorder %s21, 3
      %p335 = pnand %p333, %p334
      %p336 = pneg %p335
      // Predicated region
      $region9: #{tpu_custom_call.1} parent=5 // pred_check
        _
      $region10: #{tpu_custom_call.1} parent=5 // pred_check_branch
        %338 = sbr.rel (%p335) target = $region12
      $region11: #{tpu_custom_call.1} parent=5 // pred_region
        %s339 = ssub.s32 %s21, 1
        // Predicated region
        $region13: #{tpu_custom_call.1} parent=11 // pred_check
          %p340 = pneg %p82
        $region14: #{tpu_custom_call.1} parent=11 // pred_check_branch
          %342 = sbr.rel (%p340) target = $region16
        $region15: #{tpu_custom_call.1} parent=11 // pred_region
          _
        $region16: #{tpu_custom_call.1} parent=11 // pred_fallthru
          _
        // Predicated region
        $region17: #{tpu_custom_call.1} parent=11 // pred_check
          %p343 = pneg %p103
        $region18: #{tpu_custom_call.1} parent=11 // pred_check_branch
          %345 = sbr.rel (%p343) target = $region20
        $region19: #{tpu_custom_call.1} parent=11 // pred_region
          _
        $region20: #{tpu_custom_call.1} parent=11 // pred_fallthru
          _
        // Predicated region
        $region21: #{tpu_custom_call.1} parent=11 // pred_check
          %p346 = pneg %p150
        $region22: #{tpu_custom_call.1} parent=11 // pred_check_branch
          %348 = sbr.rel (%p346) target = $region24
        $region23: #{tpu_custom_call.1} parent=11 // pred_region
          _
        $region24: #{tpu_custom_call.1} parent=11 // pred_fallthru
          _
        // Predicated region
        $region25: #{tpu_custom_call.1} parent=11 // pred_check
          %p349 = pneg %p171
        $region26: #{tpu_custom_call.1} parent=11 // pred_check_branch
          %351 = sbr.rel (%p349) target = $region28
        $region27: #{tpu_custom_call.1} parent=11 // pred_region
          _
        $region28: #{tpu_custom_call.1} parent=11 // pred_fallthru
          _
        // Predicated region
        $region29: #{tpu_custom_call.1} parent=11 // pred_check
          %p352 = pneg %p192
        $region30: #{tpu_custom_call.1} parent=11 // pred_check_branch
          %354 = sbr.rel (%p352) target = $region32
        $region31: #{tpu_custom_call.1} parent=11 // pred_region
          _
        $region32: #{tpu_custom_call.1} parent=11 // pred_fallthru
          _
        // Predicated region
        $region33: #{tpu_custom_call.1} parent=11 // pred_check
          %p355 = pneg %p213
        $region34: #{tpu_custom_call.1} parent=11 // pred_check_branch
          %357 = sbr.rel (%p355) target = $region36
        $region35: #{tpu_custom_call.1} parent=11 // pred_region
          _
        $region36: #{tpu_custom_call.1} parent=11 // pred_fallthru
          _
        // Predicated region
        $region37: #{tpu_custom_call.1} parent=11 // pred_check
          %p358 = pneg %p234
        $region38: #{tpu_custom_call.1} parent=11 // pred_check_branch
          %360 = sbr.rel (%p358) target = $region40
        $region39: #{tpu_custom_call.1} parent=11 // pred_region
          _
        $region40: #{tpu_custom_call.1} parent=11 // pred_fallthru
          _
        // Predicated region
        $region41: #{tpu_custom_call.1} parent=11 // pred_check
          %p361 = pneg %p255
        $region42: #{tpu_custom_call.1} parent=11 // pred_check_branch
          %363 = sbr.rel (%p361) target = $region44
        $region43: #{tpu_custom_call.1} parent=11 // pred_region
          _
        $region44: #{tpu_custom_call.1} parent=11 // pred_fallthru
          _
        // Predicated region
        $region45: #{tpu_custom_call.1} parent=11 // pred_check
          %p364 = pneg %p276
        $region46: #{tpu_custom_call.1} parent=11 // pred_check_branch
          %366 = sbr.rel (%p364) target = $region48
        $region47: #{tpu_custom_call.1} parent=11 // pred_region
          _
        $region48: #{tpu_custom_call.1} parent=11 // pred_fallthru
          _
        // Predicated region
        $region49: #{tpu_custom_call.1} parent=11 // pred_check
          %p367 = pneg %p297
        $region50: #{tpu_custom_call.1} parent=11 // pred_check_branch
          %369 = sbr.rel (%p367) target = $region52
        $region51: #{tpu_custom_call.1} parent=11 // pred_region
          _
        $region52: #{tpu_custom_call.1} parent=11 // pred_fallthru
          _
      $region12: #{tpu_custom_call.1} parent=5 // pred_fallthru
        _
      %p370 = scmp.lt.s32.totalorder %s21, 2
      // Predicated region
      $region53: #{tpu_custom_call.1} parent=5 // pred_check
        %p371 = pneg %p370
      $region54: #{tpu_custom_call.1} parent=5 // pred_check_branch
        %373 = sbr.rel (%p371) target = $region56
      $region55: #{tpu_custom_call.1} parent=5 // pred_region
        // Predicated region
        $region57: #{tpu_custom_call.1} parent=55 // pred_check
          %p374 = pneg %p55
        $region58: #{tpu_custom_call.1} parent=55 // pred_check_branch
          %376 = sbr.rel (%p374) target = $region60
        $region59: #{tpu_custom_call.1} parent=55 // pred_region
          %p377 = scmp.lt.s32.totalorder %s28, 0
          %s378 = scalar_select %p377, %s28, 0
          %p379 = scmp.lt.s32.totalorder %s29, 1
          %s380 = scalar_select %p379, %s29, 1
          %s381 = smul.addr %s380, 2
          %s382 = smul.addr %s378, 4
          %s383 = sadd.s32 %s381, %s382
          %s384 = smul.addr %s383, 8
          %s385 = scalar_lea.vmem %s0, %s384
        $region60: #{tpu_custom_call.1} parent=55 // pred_fallthru
          _
        // Predicated region
        $region61: #{tpu_custom_call.1} parent=55 // pred_check
          %p386 = pneg %p123
        $region62: #{tpu_custom_call.1} parent=55 // pred_check_branch
          %388 = sbr.rel (%p386) target = $region64
        $region63: #{tpu_custom_call.1} parent=55 // pred_region
          %p389 = scmp.lt.s32.totalorder %s29, 1
          %s390 = scalar_select %p389, %s29, 1
          %s391 = smul.addr %s390, 2
          %s392 = scalar_lea.vmem %s3, %s391
        $region64: #{tpu_custom_call.1} parent=55 // pred_fallthru
          _
      $region56: #{tpu_custom_call.1} parent=5 // pred_fallthru
        _
      %p393 = scmp.le.s32.totalorder 1, %s21
      %p394 = scmp.lt.s32.totalorder %s21, 3
      %p395 = pnand %p393, %p394
      %p396 = pneg %p395
      // Predicated region
      $region65: #{tpu_custom_call.1} parent=5 // pred_check
        _
      $region66: #{tpu_custom_call.1} parent=5 // pred_check_branch
        %398 = sbr.rel (%p395) target = $region68
      $region67: #{tpu_custom_call.1} parent=5 // pred_region
        %s399 = ssub.s32 %s21, 1
        %p400 = scmp.lt.s32.totalorder %s30, 0
        %s401 = scalar_select %p400, %s30, 0
        %p402 = scmp.lt.s32.totalorder %s31, 1
        %s403 = scalar_select %p402, %s31, 1
        %s404 = smul.addr %s403, 2
        %s405 = smul.addr %s401, 4
        %s406 = sadd.s32 %s404, %s405
        %s407 = smul.addr %s406, 8
        %s408 = scalar_lea.vmem %s0, %s407
        %p409 = pneg %p61
        %p410 = pneg %p58
        %p411 = pneg %p82
        %p412 = pneg %p79
        %p413 = pneg %p103
        %p414 = pneg %p100
        %p415 = scmp.lt.s32.totalorder %s31, 1
        %s416 = scalar_select %p415, %s31, 1
        %s417 = smul.addr %s416, 2
        %s418 = scalar_lea.vmem %s3, %s417
        %p419 = pneg %p129
        %p420 = pneg %p126
        %p421 = pneg %p150
        %p422 = pneg %p147
        %p423 = pneg %p171
        %p424 = pneg %p168
        %p425 = pneg %p192
        %p426 = pneg %p189
        %p427 = pneg %p213
        %p428 = pneg %p210
        %p429 = pneg %p234
        %p430 = pneg %p231
        %p431 = pneg %p255
        %p432 = pneg %p252
        %p433 = pneg %p276
        %p434 = pneg %p273
        %p435 = pneg %p297
        %p436 = pneg %p294
        %p437 = pneg %p325
        %p438 = pneg %p322
        %s439 = sand.u32 %s312, 1
        %s440 = scalar_lea.sflag [#allocation3], %s439
        %s441 = sand.u32 %s312, 1
        %s442 = smul.addr %s441, 16
        %s443 = scalar_lea.vmem [#allocation2], %s442
        %p444 = scmp.lt.s32.totalorder %s30, 0
        %s445 = scalar_select %p444, %s30, 0
        %p446 = scmp.lt.s32.totalorder %s31, 1
        %s447 = scalar_select %p446, %s31, 1
        %s448 = smul.addr %s447, 2
        %s449 = smul.addr %s445, 4
        %s450 = sadd.s32 %s448, %s449
        %s451 = smul.addr %s450, 8
        %s452 = scalar_lea.vmem %s0, %s451
        %p453 = scmp.lt.s32.totalorder %s31, 1
        %s454 = scalar_select %p453, %s31, 1
        %s455 = smul.addr %s454, 2
        %s456 = scalar_lea.vmem %s3, %s455
        %v457 = vld [vmem:[%s452] sm:$0xff]
        %v458 = vld [vmem:[%s452 + $0x8] sm:$0xff]
        %v459 = vld [vmem:[%s1] sm:$0x3]
        %v460 = vld [vmem:[%s2] sm:$0x3]
        %v461 = vld [vmem:[%s4] sm:$0xff]
        %v462 = vld [vmem:[%s4 + $0x8] sm:$0xff]
        %v463 = vld [vmem:[%s4 + $0x10] sm:$0xff]
        %v464 = vld [vmem:[%s4 + $0x18] sm:$0xff]
        %v465 = vld [vmem:[%s4 + $0x20] sm:$0xff]
        %v466 = vld [vmem:[%s4 + $0x28] sm:$0xff]
        %v467 = vld [vmem:[%s4 + $0x30] sm:$0xff]
        %v468 = vld [vmem:[%s4 + $0x38] sm:$0xff]
        %v469 = vld [vmem:[%s4 + $0x40] sm:$0xff]
        %v470 = vld [vmem:[%s5] sm:$0xff]
        %v472 = vperm.slane %v459, 0
        %v473 = vperm.slane %v459, 1
        %v476 = vmul.f32 %v457, %v472
        %v477 = vmul.f32 %v458, %v473
        %v479 = vperm.slane %v460, 0
        %v480 = vperm.slane %v460, 1
        %v483 = vmul.f32 %v457, %v479
        %v484 = vmul.f32 %v458, %v480
        %486 = vrot.lane.b32.xlu0 %v477, 81
        %v487 = vpop.permute.xlu0 %486
        %490 = vrot.lane.b32.xlu0 %v476, 17
        %v491 = vpop.permute.xlu0 %490
        %492 = vrot.lane.b32.xlu0 %v477, 17
        %v493 = vpop.permute.xlu0 %492
        %vm494 = vcmask 138240
        %v495 = vsel %vm494, %v491, %v493
        %v498 = vsel %vm494, %v487, %v491
        %500 = vset.pattern.permute.xlu0 0
        %501 = vperm.xlu0 %500, %v461
        %v502 = vpop.permute.xlu0 %501
        %v504 = vmul.f32 %v498, %v502
        %v505 = vmul.f32 %v495, %v502
        %507 = vrot.lane.b32.xlu0 %v458, 80
        %v508 = vpop.permute.xlu0 %507
        %511 = vrot.lane.b32.xlu0 %v457, 16
        %v512 = vpop.permute.xlu0 %511
        %513 = vrot.lane.b32.xlu0 %v458, 16
        %v514 = vpop.permute.xlu0 %513
        %vm515 = vcmask 130048
        %v516 = vsel %vm515, %v512, %v514
        %v519 = vsel %vm515, %v508, %v512
        %521 = vset.pattern.permute.xlu0 0
        %522 = vperm.xlu0 %521, %v462
        %v523 = vpop.permute.xlu0 %522
        %v525 = vmul.f32 %v519, %v523
        %v526 = vmul.f32 %v516, %v523
        %528 = vrot.lane.b32.xlu0 %v484, 79
        %v529 = vpop.permute.xlu0 %528
        %532 = vrot.lane.b32.xlu0 %v483, 15
        %v533 = vpop.permute.xlu0 %532
        %534 = vrot.lane.b32.xlu0 %v484, 15
        %v535 = vpop.permute.xlu0 %534
        %vm536 = vcmask 121856
        %v537 = vsel %vm536, %v533, %v535
        %v540 = vsel %vm536, %v529, %v533
        %542 = vset.pattern.permute.xlu0 0
        %543 = vperm.xlu0 %542, %v463
        %v544 = vpop.permute.xlu0 %543
        %v546 = vmul.f32 %v540, %v544
        %v547 = vmul.f32 %v537, %v544
        %548 = vrot.lane.b32.xlu0 %v477, 65
        %v549 = vpop.permute.xlu0 %548
        %551 = vrot.lane.b32.xlu0 %v476, 1
        %v552 = vpop.permute.xlu0 %551
        %553 = vrot.lane.b32.xlu0 %v477, 1
        %v554 = vpop.permute.xlu0 %553
        %vm555 = vcmask 7168
        %v556 = vsel %vm555, %v552, %v554
        %v559 = vsel %vm555, %v549, %v552
        %561 = vset.pattern.permute.xlu0 0
        %562 = vperm.xlu0 %561, %v464
        %v563 = vpop.permute.xlu0 %562
        %v565 = vmul.f32 %v559, %v563
        %v566 = vmul.f32 %v556, %v563
        %568 = vset.pattern.permute.xlu0 0
        %569 = vperm.xlu0 %568, %v465
        %v570 = vpop.permute.xlu0 %569
        %v572 = vmul.f32 %v457, %v570
        %v573 = vmul.f32 %v458, %v570
        %574 = vrot.lane.b32.xlu0 %v483, 127
        %v575 = vpop.permute.xlu0 %574
        %576 = vrot.lane.b32.xlu0 %v484, 127
        %v577 = vpop.permute.xlu0 %576
        %vm578 = vcmask 1039360
        %v579 = vsel %vm578, %v575, %v577
        %582 = vrot.lane.b32.xlu0 %v483, 63
        %v583 = vpop.permute.xlu0 %582
        %vm585 = vcmask 515072
        %v586 = vsel %vm585, %v577, %v583
        %588 = vset.pattern.permute.xlu0 0
        %589 = vperm.xlu0 %588, %v466
        %v590 = vpop.permute.xlu0 %589
        %v592 = vmul.f32 %v579, %v590
        %v593 = vmul.f32 %v586, %v590
        %594 = vrot.lane.b32.xlu0 %v476, 113
        %v595 = vpop.permute.xlu0 %594
        %596 = vrot.lane.b32.xlu0 %v477, 113
        %v597 = vpop.permute.xlu0 %596
        %vm598 = vcmask 924672
        %v599 = vsel %vm598, %v595, %v597
        %602 = vrot.lane.b32.xlu0 %v476, 49
        %v603 = vpop.permute.xlu0 %602
        %vm605 = vcmask 400384
        %v606 = vsel %vm605, %v597, %v603
        %608 = vset.pattern.permute.xlu0 0
        %609 = vperm.xlu0 %608, %v467
        %v610 = vpop.permute.xlu0 %609
        %v612 = vmul.f32 %v599, %v610
        %v613 = vmul.f32 %v606, %v610
        %614 = vrot.lane.b32.xlu0 %v457, 112
        %v615 = vpop.permute.xlu0 %614
        %616 = vrot.lane.b32.xlu0 %v458, 112
        %v617 = vpop.permute.xlu0 %616
        %vm618 = vcmask 916480
        %v619 = vsel %vm618, %v615, %v617
        %622 = vrot.lane.b32.xlu0 %v457, 48
        %v623 = vpop.permute.xlu0 %622
        %vm625 = vcmask 392192
        %v626 = vsel %vm625, %v617, %v623
        %628 = vset.pattern.permute.xlu0 0
        %629 = vperm.xlu0 %628, %v468
        %v630 = vpop.permute.xlu0 %629
        %v632 = vmul.f32 %v619, %v630
        %v633 = vmul.f32 %v626, %v630
        %634 = vrot.lane.b32.xlu0 %v483, 111
        %v635 = vpop.permute.xlu0 %634
        %636 = vrot.lane.b32.xlu0 %v484, 111
        %v637 = vpop.permute.xlu0 %636
        %vm638 = vcmask 908288
        %v639 = vsel %vm638, %v635, %v637
        %642 = vrot.lane.b32.xlu0 %v483, 47
        %v643 = vpop.permute.xlu0 %642
        %vm645 = vcmask 384000
        %v646 = vsel %vm645, %v637, %v643
        %648 = vset.pattern.permute.xlu0 0
        %649 = vperm.xlu0 %648, %v469
        %v650 = vpop.permute.xlu0 %649
        %v652 = vmul.f32 %v639, %v650
        %v653 = vmul.f32 %v646, %v650
        %v654 = vadd.f32 %v504, %v525
        %v655 = vadd.f32 %v505, %v526
        %v656 = vadd.f32 %v546, %v565
        %v657 = vadd.f32 %v547, %v566
        %v658 = vadd.f32 %v572, %v592
        %v659 = vadd.f32 %v573, %v593
        %v660 = vadd.f32 %v612, %v632
        %v661 = vadd.f32 %v613, %v633
        %v662 = vadd.f32 %v654, %v656
        %v663 = vadd.f32 %v655, %v657
        %v664 = vadd.f32 %v658, %v660
        %v665 = vadd.f32 %v659, %v661
        %v666 = vadd.f32 %v662, %v664
        %v667 = vadd.f32 %v663, %v665
        %v668 = vadd.f32 %v666, %v652
        %v669 = vadd.f32 %v667, %v653
        %671 = vset.pattern.permute.xlu0 0
        %672 = vperm.xlu0 %671, %v470
        %v673 = vpop.permute.xlu0 %672
        %v675 = vadd.f32 %v668, %v673
        %v676 = vadd.f32 %v669, %v673
        %v677 = vmax.f32 %v675, 0.0
        %v678 = vmax.f32 %v676, 0.0
        %v679 = vld [vmem:[%s6] sm:$0xff]
        %v680 = vld [vmem:[%s7] sm:$0xff]
        %682 = vset.pattern.permute.xlu0 0
        %683 = vperm.xlu0 %682, %v679
        %v684 = vpop.permute.xlu0 %683
        %v686 = vperm.slane %v677, 0
        %v687 = vperm.slane %v678, 0
        %v688 = vmul.f32 %v684, %v686
        %v689 = vmul.f32 %v684, %v687
        %690 = vset.pattern.permute.xlu0 1
        %691 = vperm.xlu0 %690, %v679
        %v692 = vpop.permute.xlu0 %691
        %v694 = vperm.slane %v677, 1
        %v695 = vperm.slane %v678, 1
        %v696 = vmul.f32 %v692, %v694
        %v697 = vmul.f32 %v692, %v695
        %v698 = vadd.f32 %v688, %v696
        %v699 = vadd.f32 %v689, %v697
        %700 = vset.pattern.permute.xlu0 2
        %701 = vperm.xlu0 %700, %v679
        %v702 = vpop.permute.xlu0 %701
        %v704 = vperm.slane %v677, 2
        %v705 = vperm.slane %v678, 2
        %v706 = vmul.f32 %v702, %v704
        %v707 = vmul.f32 %v702, %v705
        %v708 = vadd.f32 %v698, %v706
        %v709 = vadd.f32 %v699, %v707
        %710 = vset.pattern.permute.xlu0 3
        %711 = vperm.xlu0 %710, %v679
        %v712 = vpop.permute.xlu0 %711
        %v714 = vperm.slane %v677, 3
        %v715 = vperm.slane %v678, 3
        %v716 = vmul.f32 %v712, %v714
        %v717 = vmul.f32 %v712, %v715
        %v718 = vadd.f32 %v708, %v716
        %v719 = vadd.f32 %v709, %v717
        %721 = vset.pattern.permute.xlu0 0
        %722 = vperm.xlu0 %721, %v680
        %v723 = vpop.permute.xlu0 %722
        %v725 = vadd.f32 %v718, %v723
        %v726 = vadd.f32 %v719, %v723
        %v727 = vperm.slane %v677, 4
        %v728 = vperm.slane %v678, 4
        %v729 = vmul.f32 %v684, %v727
        %v730 = vmul.f32 %v684, %v728
        %v731 = vperm.slane %v677, 5
        %v732 = vperm.slane %v678, 5
        %v733 = vmul.f32 %v692, %v731
        %v734 = vmul.f32 %v692, %v732
        %v735 = vadd.f32 %v729, %v733
        %v736 = vadd.f32 %v730, %v734
        %v737 = vperm.slane %v677, 6
        %v738 = vperm.slane %v678, 6
        %v739 = vmul.f32 %v702, %v737
        %v740 = vmul.f32 %v702, %v738
        %v741 = vadd.f32 %v735, %v739
        %v742 = vadd.f32 %v736, %v740
        %v743 = vperm.slane %v677, 7
        %v744 = vperm.slane %v678, 7
        %v745 = vmul.f32 %v712, %v743
        %v746 = vmul.f32 %v712, %v744
        %v747 = vadd.f32 %v741, %v745
        %v748 = vadd.f32 %v742, %v746
        %v749 = vadd.f32 %v747, %v723
        %v750 = vadd.f32 %v748, %v723
        %v751 = vld [vmem:[%s456] sm:$0x3]
        %v753 = vperm.slane %v751, 0
        %v754 = vperm.slane %v751, 1
        %v757 = vmul.f32 %v725, %v753
        %v758 = vmul.f32 %v726, %v754
        %v759 = vmul.f32 %v749, %v753
        %v760 = vmul.f32 %v750, %v754
        %v761 = vld [vmem:[%s8] sm:$0xff]
        %v762 = vld [vmem:[%s8 + $0x8] sm:$0xff]
        %v763 = vld [vmem:[%s8 + $0x10] sm:$0xff]
        %v764 = vld [vmem:[%s8 + $0x18] sm:$0xff]
        %v765 = vld [vmem:[%s8 + $0x20] sm:$0xff]
        %v766 = vld [vmem:[%s8 + $0x28] sm:$0xff]
        %v767 = vld [vmem:[%s8 + $0x30] sm:$0xff]
        %v768 = vld [vmem:[%s8 + $0x38] sm:$0xff]
        %v769 = vld [vmem:[%s8 + $0x40] sm:$0xff]
        %v770 = vld [vmem:[%s8 + $0x48] sm:$0xff]
        %v771 = vld [vmem:[%s8 + $0x50] sm:$0xff]
        %v772 = vld [vmem:[%s8 + $0x58] sm:$0xff]
        %v773 = vld [vmem:[%s8 + $0x60] sm:$0xff]
        %v774 = vld [vmem:[%s8 + $0x68] sm:$0xff]
        %v775 = vld [vmem:[%s8 + $0x70] sm:$0xff]
        %v776 = vld [vmem:[%s8 + $0x78] sm:$0xff]
        %v777 = vld [vmem:[%s8 + $0x80] sm:$0xff]
        %v778 = vld [vmem:[%s8 + $0x88] sm:$0xff]
        %v779 = vld [vmem:[%s9] sm:$0xff]
        %v780 = vld [vmem:[%s9 + $0x8] sm:$0xff]
        %v781 = vmul.f32 %v757, %v472
        %v782 = vmul.f32 %v758, %v473
        %v783 = vmul.f32 %v759, %v472
        %v784 = vmul.f32 %v760, %v473
        %v785 = vmul.f32 %v757, %v479
        %v786 = vmul.f32 %v758, %v480
        %v787 = vmul.f32 %v759, %v479
        %v788 = vmul.f32 %v760, %v480
        %791 = vrot.lane.b32.xlu0 %v782, 81
        %v792 = vpop.permute.xlu0 %791
        %793 = vrot.lane.b32.xlu0 %v784, 81
        %v794 = vpop.permute.xlu0 %793
        %799 = vrot.lane.b32.xlu0 %v781, 17
        %v800 = vpop.permute.xlu0 %799
        %801 = vrot.lane.b32.xlu0 %v782, 17
        %v802 = vpop.permute.xlu0 %801
        %803 = vrot.lane.b32.xlu0 %v783, 17
        %v804 = vpop.permute.xlu0 %803
        %805 = vrot.lane.b32.xlu0 %v784, 17
        %v806 = vpop.permute.xlu0 %805
        %v807 = vsel %vm494, %v800, %v802
        %v808 = vsel %vm494, %v804, %v806
        %v813 = vsel %vm494, %v792, %v800
        %v814 = vsel %vm494, %v794, %v804
        %816 = vset.pattern.permute.xlu0 0
        %817 = vperm.xlu0 %816, %v761
        %v818 = vpop.permute.xlu0 %817
        %821 = vset.pattern.permute.xlu0 0
        %822 = vperm.xlu0 %821, %v762
        %v823 = vpop.permute.xlu0 %822
        %v825 = vmul.f32 %v813, %v818
        %v826 = vmul.f32 %v807, %v818
        %v827 = vmul.f32 %v814, %v823
        %v828 = vmul.f32 %v808, %v823
        %831 = vrot.lane.b32.xlu0 %v758, 80
        %v832 = vpop.permute.xlu0 %831
        %833 = vrot.lane.b32.xlu0 %v760, 80
        %v834 = vpop.permute.xlu0 %833
        %839 = vrot.lane.b32.xlu0 %v757, 16
        %v840 = vpop.permute.xlu0 %839
        %841 = vrot.lane.b32.xlu0 %v758, 16
        %v842 = vpop.permute.xlu0 %841
        %843 = vrot.lane.b32.xlu0 %v759, 16
        %v844 = vpop.permute.xlu0 %843
        %845 = vrot.lane.b32.xlu0 %v760, 16
        %v846 = vpop.permute.xlu0 %845
        %v847 = vsel %vm515, %v840, %v842
        %v848 = vsel %vm515, %v844, %v846
        %v853 = vsel %vm515, %v832, %v840
        %v854 = vsel %vm515, %v834, %v844
        %856 = vset.pattern.permute.xlu0 0
        %857 = vperm.xlu0 %856, %v763
        %v858 = vpop.permute.xlu0 %857
        %861 = vset.pattern.permute.xlu0 0
        %862 = vperm.xlu0 %861, %v764
        %v863 = vpop.permute.xlu0 %862
        %v865 = vmul.f32 %v853, %v858
        %v866 = vmul.f32 %v847, %v858
        %v867 = vmul.f32 %v854, %v863
        %v868 = vmul.f32 %v848, %v863
        %871 = vrot.lane.b32.xlu0 %v786, 79
        %v872 = vpop.permute.xlu0 %871
        %873 = vrot.lane.b32.xlu0 %v788, 79
        %v874 = vpop.permute.xlu0 %873
        %879 = vrot.lane.b32.xlu0 %v785, 15
        %v880 = vpop.permute.xlu0 %879
        %881 = vrot.lane.b32.xlu0 %v786, 15
        %v882 = vpop.permute.xlu0 %881
        %883 = vrot.lane.b32.xlu0 %v787, 15
        %v884 = vpop.permute.xlu0 %883
        %885 = vrot.lane.b32.xlu0 %v788, 15
        %v886 = vpop.permute.xlu0 %885
        %v887 = vsel %vm536, %v880, %v882
        %v888 = vsel %vm536, %v884, %v886
        %v893 = vsel %vm536, %v872, %v880
        %v894 = vsel %vm536, %v874, %v884
        %896 = vset.pattern.permute.xlu0 0
        %897 = vperm.xlu0 %896, %v765
        %v898 = vpop.permute.xlu0 %897
        %901 = vset.pattern.permute.xlu0 0
        %902 = vperm.xlu0 %901, %v766
        %v903 = vpop.permute.xlu0 %902
        %v905 = vmul.f32 %v893, %v898
        %v906 = vmul.f32 %v887, %v898
        %v907 = vmul.f32 %v894, %v903
        %v908 = vmul.f32 %v888, %v903
        %909 = vrot.lane.b32.xlu0 %v782, 65
        %v910 = vpop.permute.xlu0 %909
        %911 = vrot.lane.b32.xlu0 %v784, 65
        %v912 = vpop.permute.xlu0 %911
        %915 = vrot.lane.b32.xlu0 %v781, 1
        %v916 = vpop.permute.xlu0 %915
        %917 = vrot.lane.b32.xlu0 %v782, 1
        %v918 = vpop.permute.xlu0 %917
        %919 = vrot.lane.b32.xlu0 %v783, 1
        %v920 = vpop.permute.xlu0 %919
        %921 = vrot.lane.b32.xlu0 %v784, 1
        %v922 = vpop.permute.xlu0 %921
        %v923 = vsel %vm555, %v916, %v918
        %v924 = vsel %vm555, %v920, %v922
        %v929 = vsel %vm555, %v910, %v916
        %v930 = vsel %vm555, %v912, %v920
        %932 = vset.pattern.permute.xlu0 0
        %933 = vperm.xlu0 %932, %v767
        %v934 = vpop.permute.xlu0 %933
        %937 = vset.pattern.permute.xlu0 0
        %938 = vperm.xlu0 %937, %v768
        %v939 = vpop.permute.xlu0 %938
        %v941 = vmul.f32 %v929, %v934
        %v942 = vmul.f32 %v923, %v934
        %v943 = vmul.f32 %v930, %v939
        %v944 = vmul.f32 %v924, %v939
        %946 = vset.pattern.permute.xlu0 0
        %947 = vperm.xlu0 %946, %v769
        %v948 = vpop.permute.xlu0 %947
        %951 = vset.pattern.permute.xlu0 0
        %952 = vperm.xlu0 %951, %v770
        %v953 = vpop.permute.xlu0 %952
        %v955 = vmul.f32 %v757, %v948
        %v956 = vmul.f32 %v758, %v948
        %v957 = vmul.f32 %v759, %v953
        %v958 = vmul.f32 %v760, %v953
        %959 = vrot.lane.b32.xlu0 %v785, 127
        %v960 = vpop.permute.xlu0 %959
        %961 = vrot.lane.b32.xlu0 %v786, 127
        %v962 = vpop.permute.xlu0 %961
        %963 = vrot.lane.b32.xlu0 %v787, 127
        %v964 = vpop.permute.xlu0 %963
        %965 = vrot.lane.b32.xlu0 %v788, 127
        %v966 = vpop.permute.xlu0 %965
        %v967 = vsel %vm578, %v960, %v962
        %v968 = vsel %vm578, %v964, %v966
        %973 = vrot.lane.b32.xlu0 %v785, 63
        %v974 = vpop.permute.xlu0 %973
        %975 = vrot.lane.b32.xlu0 %v787, 63
        %v976 = vpop.permute.xlu0 %975
        %v979 = vsel %vm585, %v962, %v974
        %v980 = vsel %vm585, %v966, %v976
        %982 = vset.pattern.permute.xlu0 0
        %983 = vperm.xlu0 %982, %v771
        %v984 = vpop.permute.xlu0 %983
        %987 = vset.pattern.permute.xlu0 0
        %988 = vperm.xlu0 %987, %v772
        %v989 = vpop.permute.xlu0 %988
        %v991 = vmul.f32 %v967, %v984
        %v992 = vmul.f32 %v979, %v984
        %v993 = vmul.f32 %v968, %v989
        %v994 = vmul.f32 %v980, %v989
        %995 = vrot.lane.b32.xlu0 %v781, 113
        %v996 = vpop.permute.xlu0 %995
        %997 = vrot.lane.b32.xlu0 %v782, 113
        %v998 = vpop.permute.xlu0 %997
        %999 = vrot.lane.b32.xlu0 %v783, 113
        %v1000 = vpop.permute.xlu0 %999
        %1001 = vrot.lane.b32.xlu0 %v784, 113
        %v1002 = vpop.permute.xlu0 %1001
        %v1003 = vsel %vm598, %v996, %v998
        %v1004 = vsel %vm598, %v1000, %v1002
        %1009 = vrot.lane.b32.xlu0 %v781, 49
        %v1010 = vpop.permute.xlu0 %1009
        %1011 = vrot.lane.b32.xlu0 %v783, 49
        %v1012 = vpop.permute.xlu0 %1011
        %v1015 = vsel %vm605, %v998, %v1010
        %v1016 = vsel %vm605, %v1002, %v1012
        %1018 = vset.pattern.permute.xlu0 0
        %1019 = vperm.xlu0 %1018, %v773
        %v1020 = vpop.permute.xlu0 %1019
        %1023 = vset.pattern.permute.xlu0 0
        %1024 = vperm.xlu0 %1023, %v774
        %v1025 = vpop.permute.xlu0 %1024
        %v1027 = vmul.f32 %v1003, %v1020
        %v1028 = vmul.f32 %v1015, %v1020
        %v1029 = vmul.f32 %v1004, %v1025
        %v1030 = vmul.f32 %v1016, %v1025
        %1031 = vrot.lane.b32.xlu0 %v757, 112
        %v1032 = vpop.permute.xlu0 %1031
        %1033 = vrot.lane.b32.xlu0 %v758, 112
        %v1034 = vpop.permute.xlu0 %1033
        %1035 = vrot.lane.b32.xlu0 %v759, 112
        %v1036 = vpop.permute.xlu0 %1035
        %1037 = vrot.lane.b32.xlu0 %v760, 112
        %v1038 = vpop.permute.xlu0 %1037
        %v1039 = vsel %vm618, %v1032, %v1034
        %v1040 = vsel %vm618, %v1036, %v1038
        %1045 = vrot.lane.b32.xlu0 %v757, 48
        %v1046 = vpop.permute.xlu0 %1045
        %1047 = vrot.lane.b32.xlu0 %v759, 48
        %v1048 = vpop.permute.xlu0 %1047
        %v1051 = vsel %vm625, %v1034, %v1046
        %v1052 = vsel %vm625, %v1038, %v1048
        %1054 = vset.pattern.permute.xlu0 0
        %1055 = vperm.xlu0 %1054, %v775
        %v1056 = vpop.permute.xlu0 %1055
        %1059 = vset.pattern.permute.xlu0 0
        %1060 = vperm.xlu0 %1059, %v776
        %v1061 = vpop.permute.xlu0 %1060
        %v1063 = vmul.f32 %v1039, %v1056
        %v1064 = vmul.f32 %v1051, %v1056
        %v1065 = vmul.f32 %v1040, %v1061
        %v1066 = vmul.f32 %v1052, %v1061
        %1067 = vrot.lane.b32.xlu0 %v785, 111
        %v1068 = vpop.permute.xlu0 %1067
        %1069 = vrot.lane.b32.xlu0 %v786, 111
        %v1070 = vpop.permute.xlu0 %1069
        %1071 = vrot.lane.b32.xlu0 %v787, 111
        %v1072 = vpop.permute.xlu0 %1071
        %1073 = vrot.lane.b32.xlu0 %v788, 111
        %v1074 = vpop.permute.xlu0 %1073
        %v1075 = vsel %vm638, %v1068, %v1070
        %v1076 = vsel %vm638, %v1072, %v1074
        %1081 = vrot.lane.b32.xlu0 %v785, 47
        %v1082 = vpop.permute.xlu0 %1081
        %1083 = vrot.lane.b32.xlu0 %v787, 47
        %v1084 = vpop.permute.xlu0 %1083
        %v1087 = vsel %vm645, %v1070, %v1082
        %v1088 = vsel %vm645, %v1074, %v1084
        %1090 = vset.pattern.permute.xlu0 0
        %1091 = vperm.xlu0 %1090, %v777
        %v1092 = vpop.permute.xlu0 %1091
        %1095 = vset.pattern.permute.xlu0 0
        %1096 = vperm.xlu0 %1095, %v778
        %v1097 = vpop.permute.xlu0 %1096
        %v1099 = vmul.f32 %v1075, %v1092
        %v1100 = vmul.f32 %v1087, %v1092
        %v1101 = vmul.f32 %v1076, %v1097
        %v1102 = vmul.f32 %v1088, %v1097
        %v1103 = vadd.f32 %v825, %v865
        %v1104 = vadd.f32 %v826, %v866
        %v1105 = vadd.f32 %v827, %v867
        %v1106 = vadd.f32 %v828, %v868
        %v1107 = vadd.f32 %v905, %v941
        %v1108 = vadd.f32 %v906, %v942
        %v1109 = vadd.f32 %v907, %v943
        %v1110 = vadd.f32 %v908, %v944
        %v1111 = vadd.f32 %v955, %v991
        %v1112 = vadd.f32 %v956, %v992
        %v1113 = vadd.f32 %v957, %v993
        %v1114 = vadd.f32 %v958, %v994
        %v1115 = vadd.f32 %v1027, %v1063
        %v1116 = vadd.f32 %v1028, %v1064
        %v1117 = vadd.f32 %v1029, %v1065
        %v1118 = vadd.f32 %v1030, %v1066
        %v1119 = vadd.f32 %v1103, %v1107
        %v1120 = vadd.f32 %v1104, %v1108
        %v1121 = vadd.f32 %v1105, %v1109
        %v1122 = vadd.f32 %v1106, %v1110
        %v1123 = vadd.f32 %v1111, %v1115
        %v1124 = vadd.f32 %v1112, %v1116
        %v1125 = vadd.f32 %v1113, %v1117
        %v1126 = vadd.f32 %v1114, %v1118
        %v1127 = vadd.f32 %v1119, %v1123
        %v1128 = vadd.f32 %v1120, %v1124
        %v1129 = vadd.f32 %v1121, %v1125
        %v1130 = vadd.f32 %v1122, %v1126
        %v1131 = vadd.f32 %v1127, %v1099
        %v1132 = vadd.f32 %v1128, %v1100
        %v1133 = vadd.f32 %v1129, %v1101
        %v1134 = vadd.f32 %v1130, %v1102
        %1136 = vset.pattern.permute.xlu0 0
        %1137 = vperm.xlu0 %1136, %v779
        %v1138 = vpop.permute.xlu0 %1137
        %1141 = vset.pattern.permute.xlu0 0
        %1142 = vperm.xlu0 %1141, %v780
        %v1143 = vpop.permute.xlu0 %1142
        %v1145 = vadd.f32 %v1131, %v1138
        %v1146 = vadd.f32 %v1132, %v1138
        %v1147 = vadd.f32 %v1133, %v1143
        %v1148 = vadd.f32 %v1134, %v1143
        %v1149 = vmax.f32 %v1145, 0.0
        %v1150 = vmax.f32 %v1146, 0.0
        %v1151 = vmax.f32 %v1147, 0.0
        %v1152 = vmax.f32 %v1148, 0.0
        %v1153 = vld [vmem:[%s10] sm:$0xff]
        %v1154 = vld [vmem:[%s11] sm:$0xff]
        %1156 = vset.pattern.permute.xlu0 0
        %1157 = vperm.xlu0 %1156, %v1153
        %v1158 = vpop.permute.xlu0 %1157
        %v1160 = vperm.slane %v1149, 0
        %v1161 = vperm.slane %v1150, 0
        %v1162 = vmul.f32 %v1158, %v1160
        %v1163 = vmul.f32 %v1158, %v1161
        %1164 = vset.pattern.permute.xlu0 1
        %1165 = vperm.xlu0 %1164, %v1153
        %v1166 = vpop.permute.xlu0 %1165
        %v1168 = vperm.slane %v1149, 1
        %v1169 = vperm.slane %v1150, 1
        %v1170 = vmul.f32 %v1166, %v1168
        %v1171 = vmul.f32 %v1166, %v1169
        %v1172 = vadd.f32 %v1162, %v1170
        %v1173 = vadd.f32 %v1163, %v1171
        %1174 = vset.pattern.permute.xlu0 2
        %1175 = vperm.xlu0 %1174, %v1153
        %v1176 = vpop.permute.xlu0 %1175
        %v1178 = vperm.slane %v1149, 2
        %v1179 = vperm.slane %v1150, 2
        %v1180 = vmul.f32 %v1176, %v1178
        %v1181 = vmul.f32 %v1176, %v1179
        %v1182 = vadd.f32 %v1172, %v1180
        %v1183 = vadd.f32 %v1173, %v1181
        %1184 = vset.pattern.permute.xlu0 3
        %1185 = vperm.xlu0 %1184, %v1153
        %v1186 = vpop.permute.xlu0 %1185
        %v1188 = vperm.slane %v1149, 3
        %v1189 = vperm.slane %v1150, 3
        %v1190 = vmul.f32 %v1186, %v1188
        %v1191 = vmul.f32 %v1186, %v1189
        %v1192 = vadd.f32 %v1182, %v1190
        %v1193 = vadd.f32 %v1183, %v1191
        %1194 = vset.pattern.permute.xlu0 4
        %1195 = vperm.xlu0 %1194, %v1153
        %v1196 = vpop.permute.xlu0 %1195
        %v1198 = vperm.slane %v1149, 4
        %v1199 = vperm.slane %v1150, 4
        %v1200 = vmul.f32 %v1196, %v1198
        %v1201 = vmul.f32 %v1196, %v1199
        %v1202 = vadd.f32 %v1192, %v1200
        %v1203 = vadd.f32 %v1193, %v1201
        %1204 = vset.pattern.permute.xlu0 5
        %1205 = vperm.xlu0 %1204, %v1153
        %v1206 = vpop.permute.xlu0 %1205
        %v1208 = vperm.slane %v1149, 5
        %v1209 = vperm.slane %v1150, 5
        %v1210 = vmul.f32 %v1206, %v1208
        %v1211 = vmul.f32 %v1206, %v1209
        %v1212 = vadd.f32 %v1202, %v1210
        %v1213 = vadd.f32 %v1203, %v1211
        %1214 = vset.pattern.permute.xlu0 6
        %1215 = vperm.xlu0 %1214, %v1153
        %v1216 = vpop.permute.xlu0 %1215
        %v1218 = vperm.slane %v1149, 6
        %v1219 = vperm.slane %v1150, 6
        %v1220 = vmul.f32 %v1216, %v1218
        %v1221 = vmul.f32 %v1216, %v1219
        %v1222 = vadd.f32 %v1212, %v1220
        %v1223 = vadd.f32 %v1213, %v1221
        %1224 = vset.pattern.permute.xlu0 7
        %1225 = vperm.xlu0 %1224, %v1153
        %v1226 = vpop.permute.xlu0 %1225
        %v1228 = vperm.slane %v1149, 7
        %v1229 = vperm.slane %v1150, 7
        %v1230 = vmul.f32 %v1226, %v1228
        %v1231 = vmul.f32 %v1226, %v1229
        %v1232 = vadd.f32 %v1222, %v1230
        %v1233 = vadd.f32 %v1223, %v1231
        %1235 = vset.pattern.permute.xlu0 0
        %1236 = vperm.xlu0 %1235, %v1154
        %v1237 = vpop.permute.xlu0 %1236
        %v1239 = vadd.f32 %v1232, %v1237
        %v1240 = vadd.f32 %v1233, %v1237
        %v1241 = vperm.slane %v1151, 0
        %v1242 = vperm.slane %v1152, 0
        %v1243 = vmul.f32 %v1158, %v1241
        %v1244 = vmul.f32 %v1158, %v1242
        %v1245 = vperm.slane %v1151, 1
        %v1246 = vperm.slane %v1152, 1
        %v1247 = vmul.f32 %v1166, %v1245
        %v1248 = vmul.f32 %v1166, %v1246
        %v1249 = vadd.f32 %v1243, %v1247
        %v1250 = vadd.f32 %v1244, %v1248
        %v1251 = vperm.slane %v1151, 2
        %v1252 = vperm.slane %v1152, 2
        %v1253 = vmul.f32 %v1176, %v1251
        %v1254 = vmul.f32 %v1176, %v1252
        %v1255 = vadd.f32 %v1249, %v1253
        %v1256 = vadd.f32 %v1250, %v1254
        %v1257 = vperm.slane %v1151, 3
        %v1258 = vperm.slane %v1152, 3
        %v1259 = vmul.f32 %v1186, %v1257
        %v1260 = vmul.f32 %v1186, %v1258
        %v1261 = vadd.f32 %v1255, %v1259
        %v1262 = vadd.f32 %v1256, %v1260
        %v1263 = vperm.slane %v1151, 4
        %v1264 = vperm.slane %v1152, 4
        %v1265 = vmul.f32 %v1196, %v1263
        %v1266 = vmul.f32 %v1196, %v1264
        %v1267 = vadd.f32 %v1261, %v1265
        %v1268 = vadd.f32 %v1262, %v1266
        %v1269 = vperm.slane %v1151, 5
        %v1270 = vperm.slane %v1152, 5
        %v1271 = vmul.f32 %v1206, %v1269
        %v1272 = vmul.f32 %v1206, %v1270
        %v1273 = vadd.f32 %v1267, %v1271
        %v1274 = vadd.f32 %v1268, %v1272
        %v1275 = vperm.slane %v1151, 6
        %v1276 = vperm.slane %v1152, 6
        %v1277 = vmul.f32 %v1216, %v1275
        %v1278 = vmul.f32 %v1216, %v1276
        %v1279 = vadd.f32 %v1273, %v1277
        %v1280 = vadd.f32 %v1274, %v1278
        %v1281 = vperm.slane %v1151, 7
        %v1282 = vperm.slane %v1152, 7
        %v1283 = vmul.f32 %v1226, %v1281
        %v1284 = vmul.f32 %v1226, %v1282
        %v1285 = vadd.f32 %v1279, %v1283
        %v1286 = vadd.f32 %v1280, %v1284
        %v1287 = vadd.f32 %v1285, %v1237
        %v1288 = vadd.f32 %v1286, %v1237
        %1293 = vrot.lane.b32.xlu0 %v1239, 96
        %v1294 = vpop.permute.xlu0 %1293
        %1295 = vrot.lane.b32.xlu0 %v1240, 96
        %v1296 = vpop.permute.xlu0 %1295
        %1297 = vrot.lane.b32.xlu0 %v1287, 96
        %v1298 = vpop.permute.xlu0 %1297
        %1299 = vrot.lane.b32.xlu0 %v1288, 96
        %v1300 = vpop.permute.xlu0 %1299
        %vm1301 = vcmask 785408
        %v1302 = vsel %vm1301, %v1294, %v1296
        %v1303 = vsel %vm1301, %v1298, %v1300
        %1306 = vst [vmem:[%s443] sm:$0xff] %v1302
        %1307 = vst [vmem:[%s443 + $0x8] sm:$0xff] %v1303
        %s1308 = sand.u32 %s312, 1
        %s1309 = scalar_lea.sflag [#allocation3], %s1308
        %s1310 = sand.u32 %s312, 1
        %s1311 = smul.addr %s1310, 16
        %s1312 = scalar_lea.vmem [#allocation2], %s1311
        // Predicated region
        $region69: #{tpu_custom_call.1} parent=67 // pred_check
          %p1313 = pneg %p322
        $region70: #{tpu_custom_call.1} parent=67 // pred_check_branch
          %1315 = sbr.rel (%p1313) target = $region72
        $region71: #{tpu_custom_call.1} parent=67 // pred_region
          %1317 = vsyncadd %s1309, 0
          %s1318 = smul.addr %s31, 2
          %s1319 = smul.addr %s30, 4
          %s1320 = sadd.s32 %s1318, %s1319
          %s1321 = smul.addr %s1320, 8
          %s1322 = scalar_lea.hbm %s12, %s1321
          %s1323 = sshll.u32 %s1312, 4
          %s1324 = int_to_ptr.vmem [resolvable:$true] %s1323
          %s1325 = sshll.u32 %s1322, 4
          %s1326 = int_to_ptr.hbm [resolvable:$true] %s1325
          %1331 = dma.vmem_to_hbm [thread:$0]  %s1324, 256, %s1326, %s1309, 128, 128, 8
        $region72: #{tpu_custom_call.1} parent=67 // pred_fallthru
          _
      $region68: #{tpu_custom_call.1} parent=5 // pred_fallthru
        _
      %p1332 = scmp.le.s32.totalorder 2, %s21
      // Predicated region
      $region73: #{tpu_custom_call.1} parent=5 // pred_check
        %p1333 = pneg %p1332
      $region74: #{tpu_custom_call.1} parent=5 // pred_check_branch
        %1335 = sbr.rel (%p1333) target = $region76
      $region75: #{tpu_custom_call.1} parent=5 // pred_region
        %s1336 = ssub.s32 %s21, 2
        // Predicated region
        $region77: #{tpu_custom_call.1} parent=75 // pred_check
          %p1337 = pneg %p328
        $region78: #{tpu_custom_call.1} parent=75 // pred_check_branch
          %1339 = sbr.rel (%p1337) target = $region80
        $region79: #{tpu_custom_call.1} parent=75 // pred_region
          %s1340 = sand.u32 %s313, 1
          %s1341 = scalar_lea.sflag [#allocation3], %s1340
          %s1342 = sand.u32 %s313, 1
          %s1343 = smul.addr %s1342, 16
          %s1344 = scalar_lea.vmem [#allocation2], %s1343
          %1346 = dma.done %s1341, 256
        $region80: #{tpu_custom_call.1} parent=75 // pred_fallthru
          _
      $region76: #{tpu_custom_call.1} parent=5 // pred_fallthru
        _
    $region6: #{tpu_custom_call.1} parent=1 // loop_footer
      %s25 = sadd.s32 1, %s21
    $region7: #{tpu_custom_call.1} parent=1 // loop_footer_branch
      %20 = sbr.rel target = $region3
    $region8: #{tpu_custom_call.1} parent=1 // loop_exit
      _
    %1347 = vsyncpa [#allocation3], 1
    %s1348 = scalar_lea.sflag [#allocation3], 1
    %1349 = vsyncpa %s1348, 1

</llo_original>
